<compile_context>
chip_gen: v7x
topology: tpu7x:2x2x1
jax: 0.10.0
libtpu: 0.0.40
codegen_flags: <defaults>
</compile_context>

<pallas_src>
import numpy as np
import jax
import jax.numpy as jnp
from jax.experimental import pallas as pl
from jax.experimental.pallas import tpu as pltpu

# ----- small, deterministic hyper-parameters consistent with the module -----
KPI_LEN = 4                 # conv input channels  (kpi_len)
NAME_LEN = 16               # conv input length    (name_len)
CONV_OUT = 8                # conv_out_size[-1]
KER = 5                     # ker_size[1]
SZ = NAME_LEN - KER + 1     # 12
FEAT = SZ * CONV_OUT        # 96  (LSTM input feature size)
PREDICT_LEN = 20            # fixed in the source
HIDDEN = 32                 # args.hidden_size (small)
OUT_DIM = NAME_LEN + 1      # dense output = name_len + 1
LANE = 128                  # lane-dense padding target


def _vmem_spec():
    return pl.BlockSpec(memory_space=pltpu.MemorySpace.VMEM)


# ------------------------------ fused Pallas kernel --------------------------

def fused_forward_kernel(x_ref, wconv_ref, bconv_ref, wih_ref, whh_ref,
                         blstm_ref, wdense_ref, bdense_ref, o_ref):
    """Whole forward in one kernel; every intermediate lives in vregs/VMEM.

    x_ref:      (N, C*L)      bf16, TIME-MAJOR rows: n = t*B + b
    wconv_ref:  (C*L, 128)    bf16  (Toeplitz conv weight, zero-padded lanes)
    bconv_ref:  (1, 128)      f32   (zero-padded)
    wih_ref:    (128, 128)    bf16  (rows >= FEAT are zero)
    whh_ref:    (H, 4H)       bf16
    blstm_ref:  (1, 4H)       f32   (b_ih + b_hh)
    wdense_ref: (H, 128)      bf16  (cols >= OUT_DIM are zero)
    bdense_ref: (1, 128)      f32   (zero-padded)
    o_ref:      (B, 128)      f32   (wrapper slices [:, :OUT_DIM])
    """
    B = o_ref.shape[0]
    T = PREDICT_LEN
    H = HIDDEN

    # 1) Conv1d + bias + ReLU as a single lane-dense GEMM over all N rows.
    conv = jnp.dot(x_ref[...], wconv_ref[...],
                   preferred_element_type=jnp.float32)
    conv = jnp.maximum(conv + bconv_ref[...], 0.0)        # (N, 128) f32; pad cols stay 0

    # 2) LSTM input projection hoisted out of the recurrence (+ combined bias).
    #    Stays as a vreg value -- no VMEM scratch round-trip.
    gates_x = jnp.dot(conv.astype(jnp.bfloat16), wih_ref[...],
                      preferred_element_type=jnp.float32) + blstm_ref[...]   # (N, 4H)

    whh = whh_ref[...]                                     # (H, 4H) bf16

    # 3) Recurrence: static Python loop, static contiguous slices (time-major
    #    row order), only the tiny h @ W_hh matmul on the serial path.
    h = jnp.zeros((B, H), jnp.float32)
    c = jnp.zeros((B, H), jnp.float32)
    for t in range(T):
        g = gates_x[t * B:(t + 1) * B, :] + jnp.dot(
            h.astype(jnp.bfloat16), whh, preferred_element_type=jnp.float32)
        sig = jax.nn.sigmoid(g)          # one 128-wide EUP pass covers i, f, o
        i = sig[:, 0:H]                  # PyTorch gate order: i, f, g, o
        f = sig[:, H:2 * H]
        o = sig[:, 3 * H:4 * H]
        gg = jnp.tanh(g[:, 2 * H:3 * H])
        c = f * c + i * gg
        h = o * jnp.tanh(c)

    # 4) Dense epilogue, lane-dense padded output store.
    y = jnp.dot(h.astype(jnp.bfloat16), wdense_ref[...],
                preferred_element_type=jnp.float32) + bdense_ref[...]
    o_ref[...] = y


# ------------------------------ params & prep --------------------------------

def init_params(key):
    ks = jax.random.split(key, 8)
    s = 0.1
    return {
        "conv_w": s * jax.random.normal(ks[0], (CONV_OUT, KPI_LEN, KER), jnp.float32),
        "conv_b": s * jax.random.normal(ks[1], (CONV_OUT,), jnp.float32),
        "w_ih":   s * jax.random.normal(ks[2], (4 * HIDDEN, FEAT), jnp.float32),
        "w_hh":   s * jax.random.normal(ks[3], (4 * HIDDEN, HIDDEN), jnp.float32),
        "b_ih":   s * jax.random.normal(ks[4], (4 * HIDDEN,), jnp.float32),
        "b_hh":   s * jax.random.normal(ks[5], (4 * HIDDEN,), jnp.float32),
        "dense_w": s * jax.random.normal(ks[6], (OUT_DIM, HIDDEN), jnp.float32),
        "dense_b": s * jax.random.normal(ks[7], (OUT_DIM,), jnp.float32),
    }


def prepare_params(params):
    """One-time host-side weight prep: Toeplitz-expand the conv weight so the
    conv is a single lane-dense GEMM whose output columns already follow
    torch's (Cout, SZ) C-major flatten; zero-pad all lane dims to 128."""
    conv_w = params["conv_w"]                                   # (O, I, K)
    p = jnp.arange(NAME_LEN)
    l = jnp.arange(SZ)
    k = p[:, None] - l[None, :]                                 # (L, SZ)
    valid = (k >= 0) & (k < KER)
    kc = jnp.clip(k, 0, KER - 1)
    gathered = conv_w[:, :, kc]                                 # (O, I, L, SZ)
    gathered = jnp.where(valid[None, None, :, :], gathered, 0.0)
    # W_toep[i*L + p, o*SZ + l] = conv_w[o, i, p - l]  (zero outside the taps)
    w_toep = jnp.transpose(gathered, (1, 2, 0, 3)).reshape(
        KPI_LEN * NAME_LEN, CONV_OUT * SZ)                      # (64, 96)

    w_conv_pad = jnp.zeros((KPI_LEN * NAME_LEN, LANE), jnp.float32
                           ).at[:, :CONV_OUT * SZ].set(w_toep)
    b_conv_pad = jnp.zeros((1, LANE), jnp.float32
                           ).at[0, :CONV_OUT * SZ].set(jnp.repeat(params["conv_b"], SZ))

    # Padded rows of w_ih MUST be zero so pad columns never leak into gates.
    w_ih_pad = jnp.zeros((LANE, 4 * HIDDEN), jnp.float32
                         ).at[:FEAT, :].set(params["w_ih"].T)

    w_dense_pad = jnp.zeros((HIDDEN, LANE), jnp.float32
                            ).at[:, :OUT_DIM].set(params["dense_w"].T)
    b_dense_pad = jnp.zeros((1, LANE), jnp.float32
                            ).at[0, :OUT_DIM].set(params["dense_b"])

    return {
        "w_conv": w_conv_pad.astype(jnp.bfloat16),              # (64, 128)
        "b_conv": b_conv_pad,                                   # (1, 128) f32
        "w_ih_t": w_ih_pad.astype(jnp.bfloat16),                # (128, 128)
        "w_hh_t": params["w_hh"].T.astype(jnp.bfloat16),        # (32, 128)
        "b_lstm": (params["b_ih"] + params["b_hh"]
                   ).reshape(1, 4 * HIDDEN).astype(jnp.float32),
        "w_dense_t": w_dense_pad.astype(jnp.bfloat16),          # (32, 128)
        "b_dense": b_dense_pad,                                 # (1, 128) f32
    }


# ------------------------------ model forward --------------------------------

@jax.jit
def forward(x, prep):
    B0, B1, C, L = x.shape
    N = B0 * B1
    assert N % PREDICT_LEN == 0, "B0*B1 must be a multiple of predict_len (=20)"
    lstm_b = N // PREDICT_LEN                  # torch.reshape(-1, predict_len, F)

    # Time-major row reorder (n = t*B + b) so the kernel's per-step gate slice
    # is a static contiguous row range; cast to bf16 to halve the input DMA.
    x2d = (x.reshape(lstm_b, PREDICT_LEN, C * L)
            .transpose(1, 0, 2)
            .reshape(N, C * L)
            .astype(jnp.bfloat16))

    y_pad = pl.pallas_call(
        fused_forward_kernel,
        out_shape=jax.ShapeDtypeStruct((lstm_b, LANE), jnp.float32),
        in_specs=[_vmem_spec()] * 8,
        out_specs=_vmem_spec(),
    )(x2d, prep["w_conv"], prep["b_conv"], prep["w_ih_t"], prep["w_hh_t"],
      prep["b_lstm"], prep["w_dense_t"], prep["b_dense"])
    return y_pad[:, :OUT_DIM]


# --------------------------- pure-JAX reference ------------------------------

def reference_forward(x, params):
    B0, B1, C, L = x.shape
    xf = x.reshape(B0 * B1, C, L)
    lout = L - KER + 1
    conv = sum(jnp.einsum("oi,nil->nol", params["conv_w"][:, :, k],
                          xf[:, :, k:k + lout]) for k in range(KER))
    conv = jnp.maximum(conv + params["conv_b"][None, :, None], 0.0)
    xr = conv.reshape(-1, PREDICT_LEN, SZ * CONV_OUT)

    H = HIDDEN
    wih_t = params["w_ih"].T
    whh_t = params["w_hh"].T
    b = params["b_ih"] + params["b_hh"]

    def step(carry, x_t):
        h, c = carry
        gates = x_t @ wih_t + h @ whh_t + b
        i = jax.nn.sigmoid(gates[:, 0:H])
        f = jax.nn.sigmoid(gates[:, H:2 * H])
        g = jnp.tanh(gates[:, 2 * H:3 * H])
        o = jax.nn.sigmoid(gates[:, 3 * H:4 * H])
        c = f * c + i * g
        h = o * jnp.tanh(c)
        return (h, c), None

    B = xr.shape[0]
    init = (jnp.zeros((B, H), jnp.float32), jnp.zeros((B, H), jnp.float32))
    (h_last, _), _ = jax.lax.scan(step, init, jnp.transpose(xr, (1, 0, 2)))
    return h_last @ params["dense_w"].T + params["dense_b"]


if __name__ == "__main__":
    key = jax.random.PRNGKey(0)
    pkey, xkey = jax.random.split(key)
    params = init_params(pkey)
    prep = prepare_params(params)
    # B0=2, B1=predict_len=20 so the LSTM batch is (2*20)/20 = 2
    x = jax.random.normal(xkey, (2, PREDICT_LEN, KPI_LEN, NAME_LEN), jnp.float32)

    y = jax.block_until_ready(forward(x, prep))
    y_ref = jax.block_until_ready(reference_forward(x, params))

    assert y.shape == (2, OUT_DIM)
    # Kernel feeds the MXU bf16 operands (f32 accumulate), so tolerance vs. the
    # pure-f32 reference is relaxed accordingly.
    np.testing.assert_allclose(np.asarray(y), np.asarray(y_ref),
                               rtol=2e-2, atol=2e-2)
    print("KERNEL_OK")
</pallas_src>

<mosaic_0001>
module attributes {stable_mosaic.version = 11 : i64} {
  func.func @fused_forward_kernel(%arg0: memref<40x64xbf16, #tpu.memory_space<vmem>>, %arg1: memref<64x128xbf16, #tpu.memory_space<vmem>>, %arg2: memref<1x128xf32, #tpu.memory_space<vmem>>, %arg3: memref<128x128xbf16, #tpu.memory_space<vmem>>, %arg4: memref<32x128xbf16, #tpu.memory_space<vmem>>, %arg5: memref<1x128xf32, #tpu.memory_space<vmem>>, %arg6: memref<32x128xbf16, #tpu.memory_space<vmem>>, %arg7: memref<1x128xf32, #tpu.memory_space<vmem>>, %arg8: memref<2x128xf32, #tpu.memory_space<vmem>>) attributes {dimension_semantics = [], scalar_prefetch = 0 : i64, scratch_operands = 0 : i64, tpu.core_type = #tpu.core_type<tc>} {
    %c0 = arith.constant 0 : index
    %c0_0 = arith.constant 0 : index
    %0 = vector.load %arg0[%c0, %c0_0] : memref<40x64xbf16, #tpu.memory_space<vmem>>, vector<40x64xbf16>
    %c0_1 = arith.constant 0 : index
    %c0_2 = arith.constant 0 : index
    %1 = vector.load %arg1[%c0_1, %c0_2] : memref<64x128xbf16, #tpu.memory_space<vmem>>, vector<64x128xbf16>
    %cst = arith.constant dense<0.000000e+00> : vector<40x128xf32>
    %2 = tpu.matmul %0, %1, %cst {dimension_numbers = #tpu.dot_dimension_numbers<[1], [0], [0], [1], [0, 0, 1, 1], [], []>} : vector<40x64xbf16>, vector<64x128xbf16>, vector<40x128xf32> -> vector<40x128xf32>
    %c0_3 = arith.constant 0 : index
    %c0_4 = arith.constant 0 : index
    %3 = vector.load %arg2[%c0_3, %c0_4] : memref<1x128xf32, #tpu.memory_space<vmem>>, vector<1x128xf32>
    %4 = vector.broadcast %3 : vector<1x128xf32> to vector<40x128xf32>
    %5 = arith.addf %2, %4 : vector<40x128xf32>
    %cst_5 = arith.constant 0.000000e+00 : f32
    %6 = vector.broadcast %cst_5 : f32 to vector<40x128xf32>
    %7 = arith.maximumf %5, %6 : vector<40x128xf32>
    %8 = arith.truncf %7 : vector<40x128xf32> to vector<40x128xbf16>
    %c0_6 = arith.constant 0 : index
    %c0_7 = arith.constant 0 : index
    %9 = vector.load %arg3[%c0_6, %c0_7] : memref<128x128xbf16, #tpu.memory_space<vmem>>, vector<128x128xbf16>
    %cst_8 = arith.constant dense<0.000000e+00> : vector<40x128xf32>
    %10 = tpu.matmul %8, %9, %cst_8 {dimension_numbers = #tpu.dot_dimension_numbers<[1], [0], [0], [1], [0, 0, 1, 1], [], []>} : vector<40x128xbf16>, vector<128x128xbf16>, vector<40x128xf32> -> vector<40x128xf32>
    %c0_9 = arith.constant 0 : index
    %c0_10 = arith.constant 0 : index
    %11 = vector.load %arg5[%c0_9, %c0_10] : memref<1x128xf32, #tpu.memory_space<vmem>>, vector<1x128xf32>
    %12 = vector.broadcast %11 : vector<1x128xf32> to vector<40x128xf32>
    %13 = arith.addf %10, %12 : vector<40x128xf32>
    %c0_11 = arith.constant 0 : index
    %c0_12 = arith.constant 0 : index
    %14 = vector.load %arg4[%c0_11, %c0_12] : memref<32x128xbf16, #tpu.memory_space<vmem>>, vector<32x128xbf16>
    %cst_13 = arith.constant 0.000000e+00 : f32
    %15 = vector.broadcast %cst_13 : f32 to vector<2x32xf32>
    %cst_14 = arith.constant 0.000000e+00 : f32
    %16 = vector.broadcast %cst_14 : f32 to vector<2x32xf32>
    %17 = vector.extract_strided_slice %13 {offsets = [0, 0], sizes = [2, 128], strides = [1, 1]} : vector<40x128xf32> to vector<2x128xf32>
    %18 = arith.truncf %15 : vector<2x32xf32> to vector<2x32xbf16>
    %cst_15 = arith.constant dense<0.000000e+00> : vector<2x128xf32>
    %19 = tpu.matmul %18, %14, %cst_15 {dimension_numbers = #tpu.dot_dimension_numbers<[1], [0], [0], [1], [0, 0, 1, 1], [], []>} : vector<2x32xbf16>, vector<32x128xbf16>, vector<2x128xf32> -> vector<2x128xf32>
    %20 = arith.addf %17, %19 : vector<2x128xf32>
    %21 = arith.negf %20 : vector<2x128xf32>
    %22 = math.exp %21 : vector<2x128xf32>
    %cst_16 = arith.constant 1.000000e+00 : f32
    %23 = vector.broadcast %cst_16 : f32 to vector<2x128xf32>
    %24 = arith.addf %23, %22 : vector<2x128xf32>
    %25 = arith.divf %23, %24 : vector<2x128xf32>
    %26 = vector.extract_strided_slice %25 {offsets = [0, 0], sizes = [2, 32], strides = [1, 1]} : vector<2x128xf32> to vector<2x32xf32>
    %27 = vector.extract_strided_slice %25 {offsets = [0, 32], sizes = [2, 32], strides = [1, 1]} : vector<2x128xf32> to vector<2x32xf32>
    %28 = vector.extract_strided_slice %25 {offsets = [0, 96], sizes = [2, 32], strides = [1, 1]} : vector<2x128xf32> to vector<2x32xf32>
    %29 = vector.extract_strided_slice %20 {offsets = [0, 64], sizes = [2, 32], strides = [1, 1]} : vector<2x128xf32> to vector<2x32xf32>
    %30 = math.tanh %29 : vector<2x32xf32>
    %31 = arith.mulf %27, %16 : vector<2x32xf32>
    %32 = arith.mulf %26, %30 : vector<2x32xf32>
    %33 = arith.addf %31, %32 : vector<2x32xf32>
    %34 = math.tanh %33 : vector<2x32xf32>
    %35 = arith.mulf %28, %34 : vector<2x32xf32>
    %36 = vector.extract_strided_slice %13 {offsets = [2, 0], sizes = [2, 128], strides = [1, 1]} : vector<40x128xf32> to vector<2x128xf32>
    %37 = arith.truncf %35 : vector<2x32xf32> to vector<2x32xbf16>
    %cst_17 = arith.constant dense<0.000000e+00> : vector<2x128xf32>
    %38 = tpu.matmul %37, %14, %cst_17 {dimension_numbers = #tpu.dot_dimension_numbers<[1], [0], [0], [1], [0, 0, 1, 1], [], []>} : vector<2x32xbf16>, vector<32x128xbf16>, vector<2x128xf32> -> vector<2x128xf32>
    %39 = arith.addf %36, %38 : vector<2x128xf32>
    %40 = arith.negf %39 : vector<2x128xf32>
    %41 = math.exp %40 : vector<2x128xf32>
    %cst_18 = arith.constant 1.000000e+00 : f32
    %42 = vector.broadcast %cst_18 : f32 to vector<2x128xf32>
    %43 = arith.addf %42, %41 : vector<2x128xf32>
    %44 = arith.divf %42, %43 : vector<2x128xf32>
    %45 = vector.extract_strided_slice %44 {offsets = [0, 0], sizes = [2, 32], strides = [1, 1]} : vector<2x128xf32> to vector<2x32xf32>
    %46 = vector.extract_strided_slice %44 {offsets = [0, 32], sizes = [2, 32], strides = [1, 1]} : vector<2x128xf32> to vector<2x32xf32>
    %47 = vector.extract_strided_slice %44 {offsets = [0, 96], sizes = [2, 32], strides = [1, 1]} : vector<2x128xf32> to vector<2x32xf32>
    %48 = vector.extract_strided_slice %39 {offsets = [0, 64], sizes = [2, 32], strides = [1, 1]} : vector<2x128xf32> to vector<2x32xf32>
    %49 = math.tanh %48 : vector<2x32xf32>
    %50 = arith.mulf %46, %33 : vector<2x32xf32>
    %51 = arith.mulf %45, %49 : vector<2x32xf32>
    %52 = arith.addf %50, %51 : vector<2x32xf32>
    %53 = math.tanh %52 : vector<2x32xf32>
    %54 = arith.mulf %47, %53 : vector<2x32xf32>
    %55 = vector.extract_strided_slice %13 {offsets = [4, 0], sizes = [2, 128], strides = [1, 1]} : vector<40x128xf32> to vector<2x128xf32>
    %56 = arith.truncf %54 : vector<2x32xf32> to vector<2x32xbf16>
    %cst_19 = arith.constant dense<0.000000e+00> : vector<2x128xf32>
    %57 = tpu.matmul %56, %14, %cst_19 {dimension_numbers = #tpu.dot_dimension_numbers<[1], [0], [0], [1], [0, 0, 1, 1], [], []>} : vector<2x32xbf16>, vector<32x128xbf16>, vector<2x128xf32> -> vector<2x128xf32>
    %58 = arith.addf %55, %57 : vector<2x128xf32>
    %59 = arith.negf %58 : vector<2x128xf32>
    %60 = math.exp %59 : vector<2x128xf32>
    %cst_20 = arith.constant 1.000000e+00 : f32
    %61 = vector.broadcast %cst_20 : f32 to vector<2x128xf32>
    %62 = arith.addf %61, %60 : vector<2x128xf32>
    %63 = arith.divf %61, %62 : vector<2x128xf32>
    %64 = vector.extract_strided_slice %63 {offsets = [0, 0], sizes = [2, 32], strides = [1, 1]} : vector<2x128xf32> to vector<2x32xf32>
    %65 = vector.extract_strided_slice %63 {offsets = [0, 32], sizes = [2, 32], strides = [1, 1]} : vector<2x128xf32> to vector<2x32xf32>
    %66 = vector.extract_strided_slice %63 {offsets = [0, 96], sizes = [2, 32], strides = [1, 1]} : vector<2x128xf32> to vector<2x32xf32>
    %67 = vector.extract_strided_slice %58 {offsets = [0, 64], sizes = [2, 32], strides = [1, 1]} : vector<2x128xf32> to vector<2x32xf32>
    %68 = math.tanh %67 : vector<2x32xf32>
    %69 = arith.mulf %65, %52 : vector<2x32xf32>
    %70 = arith.mulf %64, %68 : vector<2x32xf32>
    %71 = arith.addf %69, %70 : vector<2x32xf32>
    %72 = math.tanh %71 : vector<2x32xf32>
    %73 = arith.mulf %66, %72 : vector<2x32xf32>
    %74 = vector.extract_strided_slice %13 {offsets = [6, 0], sizes = [2, 128], strides = [1, 1]} : vector<40x128xf32> to vector<2x128xf32>
    %75 = arith.truncf %73 : vector<2x32xf32> to vector<2x32xbf16>
    %cst_21 = arith.constant dense<0.000000e+00> : vector<2x128xf32>
    %76 = tpu.matmul %75, %14, %cst_21 {dimension_numbers = #tpu.dot_dimension_numbers<[1], [0], [0], [1], [0, 0, 1, 1], [], []>} : vector<2x32xbf16>, vector<32x128xbf16>, vector<2x128xf32> -> vector<2x128xf32>
    %77 = arith.addf %74, %76 : vector<2x128xf32>
    %78 = arith.negf %77 : vector<2x128xf32>
    %79 = math.exp %78 : vector<2x128xf32>
    %cst_22 = arith.constant 1.000000e+00 : f32
    %80 = vector.broadcast %cst_22 : f32 to vector<2x128xf32>
    %81 = arith.addf %80, %79 : vector<2x128xf32>
    %82 = arith.divf %80, %81 : vector<2x128xf32>
    %83 = vector.extract_strided_slice %82 {offsets = [0, 0], sizes = [2, 32], strides = [1, 1]} : vector<2x128xf32> to vector<2x32xf32>
    %84 = vector.extract_strided_slice %82 {offsets = [0, 32], sizes = [2, 32], strides = [1, 1]} : vector<2x128xf32> to vector<2x32xf32>
    %85 = vector.extract_strided_slice %82 {offsets = [0, 96], sizes = [2, 32], strides = [1, 1]} : vector<2x128xf32> to vector<2x32xf32>
    %86 = vector.extract_strided_slice %77 {offsets = [0, 64], sizes = [2, 32], strides = [1, 1]} : vector<2x128xf32> to vector<2x32xf32>
    %87 = math.tanh %86 : vector<2x32xf32>
    %88 = arith.mulf %84, %71 : vector<2x32xf32>
    %89 = arith.mulf %83, %87 : vector<2x32xf32>
    %90 = arith.addf %88, %89 : vector<2x32xf32>
    %91 = math.tanh %90 : vector<2x32xf32>
    %92 = arith.mulf %85, %91 : vector<2x32xf32>
    %93 = vector.extract_strided_slice %13 {offsets = [8, 0], sizes = [2, 128], strides = [1, 1]} : vector<40x128xf32> to vector<2x128xf32>
    %94 = arith.truncf %92 : vector<2x32xf32> to vector<2x32xbf16>
    %cst_23 = arith.constant dense<0.000000e+00> : vector<2x128xf32>
    %95 = tpu.matmul %94, %14, %cst_23 {dimension_numbers = #tpu.dot_dimension_numbers<[1], [0], [0], [1], [0, 0, 1, 1], [], []>} : vector<2x32xbf16>, vector<32x128xbf16>, vector<2x128xf32> -> vector<2x128xf32>
    %96 = arith.addf %93, %95 : vector<2x128xf32>
    %97 = arith.negf %96 : vector<2x128xf32>
    %98 = math.exp %97 : vector<2x128xf32>
    %cst_24 = arith.constant 1.000000e+00 : f32
    %99 = vector.broadcast %cst_24 : f32 to vector<2x128xf32>
    %100 = arith.addf %99, %98 : vector<2x128xf32>
    %101 = arith.divf %99, %100 : vector<2x128xf32>
    %102 = vector.extract_strided_slice %101 {offsets = [0, 0], sizes = [2, 32], strides = [1, 1]} : vector<2x128xf32> to vector<2x32xf32>
    %103 = vector.extract_strided_slice %101 {offsets = [0, 32], sizes = [2, 32], strides = [1, 1]} : vector<2x128xf32> to vector<2x32xf32>
    %104 = vector.extract_strided_slice %101 {offsets = [0, 96], sizes = [2, 32], strides = [1, 1]} : vector<2x128xf32> to vector<2x32xf32>
    %105 = vector.extract_strided_slice %96 {offsets = [0, 64], sizes = [2, 32], strides = [1, 1]} : vector<2x128xf32> to vector<2x32xf32>
    %106 = math.tanh %105 : vector<2x32xf32>
    %107 = arith.mulf %103, %90 : vector<2x32xf32>
    %108 = arith.mulf %102, %106 : vector<2x32xf32>
    %109 = arith.addf %107, %108 : vector<2x32xf32>
    %110 = math.tanh %109 : vector<2x32xf32>
    %111 = arith.mulf %104, %110 : vector<2x32xf32>
    %112 = vector.extract_strided_slice %13 {offsets = [10, 0], sizes = [2, 128], strides = [1, 1]} : vector<40x128xf32> to vector<2x128xf32>
    %113 = arith.truncf %111 : vector<2x32xf32> to vector<2x32xbf16>
    %cst_25 = arith.constant dense<0.000000e+00> : vector<2x128xf32>
    %114 = tpu.matmul %113, %14, %cst_25 {dimension_numbers = #tpu.dot_dimension_numbers<[1], [0], [0], [1], [0, 0, 1, 1], [], []>} : vector<2x32xbf16>, vector<32x128xbf16>, vector<2x128xf32> -> vector<2x128xf32>
    %115 = arith.addf %112, %114 : vector<2x128xf32>
    %116 = arith.negf %115 : vector<2x128xf32>
    %117 = math.exp %116 : vector<2x128xf32>
    %cst_26 = arith.constant 1.000000e+00 : f32
    %118 = vector.broadcast %cst_26 : f32 to vector<2x128xf32>
    %119 = arith.addf %118, %117 : vector<2x128xf32>
    %120 = arith.divf %118, %119 : vector<2x128xf32>
    %121 = vector.extract_strided_slice %120 {offsets = [0, 0], sizes = [2, 32], strides = [1, 1]} : vector<2x128xf32> to vector<2x32xf32>
    %122 = vector.extract_strided_slice %120 {offsets = [0, 32], sizes = [2, 32], strides = [1, 1]} : vector<2x128xf32> to vector<2x32xf32>
    %123 = vector.extract_strided_slice %120 {offsets = [0, 96], sizes = [2, 32], strides = [1, 1]} : vector<2x128xf32> to vector<2x32xf32>
    %124 = vector.extract_strided_slice %115 {offsets = [0, 64], sizes = [2, 32], strides = [1, 1]} : vector<2x128xf32> to vector<2x32xf32>
    %125 = math.tanh %124 : vector<2x32xf32>
    %126 = arith.mulf %122, %109 : vector<2x32xf32>
    %127 = arith.mulf %121, %125 : vector<2x32xf32>
    %128 = arith.addf %126, %127 : vector<2x32xf32>
    %129 = math.tanh %128 : vector<2x32xf32>
    %130 = arith.mulf %123, %129 : vector<2x32xf32>
    %131 = vector.extract_strided_slice %13 {offsets = [12, 0], sizes = [2, 128], strides = [1, 1]} : vector<40x128xf32> to vector<2x128xf32>
    %132 = arith.truncf %130 : vector<2x32xf32> to vector<2x32xbf16>
    %cst_27 = arith.constant dense<0.000000e+00> : vector<2x128xf32>
    %133 = tpu.matmul %132, %14, %cst_27 {dimension_numbers = #tpu.dot_dimension_numbers<[1], [0], [0], [1], [0, 0, 1, 1], [], []>} : vector<2x32xbf16>, vector<32x128xbf16>, vector<2x128xf32> -> vector<2x128xf32>
    %134 = arith.addf %131, %133 : vector<2x128xf32>
    %135 = arith.negf %134 : vector<2x128xf32>
    %136 = math.exp %135 : vector<2x128xf32>
    %cst_28 = arith.constant 1.000000e+00 : f32
    %137 = vector.broadcast %cst_28 : f32 to vector<2x128xf32>
    %138 = arith.addf %137, %136 : vector<2x128xf32>
    %139 = arith.divf %137, %138 : vector<2x128xf32>
    %140 = vector.extract_strided_slice %139 {offsets = [0, 0], sizes = [2, 32], strides = [1, 1]} : vector<2x128xf32> to vector<2x32xf32>
    %141 = vector.extract_strided_slice %139 {offsets = [0, 32], sizes = [2, 32], strides = [1, 1]} : vector<2x128xf32> to vector<2x32xf32>
    %142 = vector.extract_strided_slice %139 {offsets = [0, 96], sizes = [2, 32], strides = [1, 1]} : vector<2x128xf32> to vector<2x32xf32>
    %143 = vector.extract_strided_slice %134 {offsets = [0, 64], sizes = [2, 32], strides = [1, 1]} : vector<2x128xf32> to vector<2x32xf32>
    %144 = math.tanh %143 : vector<2x32xf32>
    %145 = arith.mulf %141, %128 : vector<2x32xf32>
    %146 = arith.mulf %140, %144 : vector<2x32xf32>
    %147 = arith.addf %145, %146 : vector<2x32xf32>
    %148 = math.tanh %147 : vector<2x32xf32>
    %149 = arith.mulf %142, %148 : vector<2x32xf32>
    %150 = vector.extract_strided_slice %13 {offsets = [14, 0], sizes = [2, 128], strides = [1, 1]} : vector<40x128xf32> to vector<2x128xf32>
    %151 = arith.truncf %149 : vector<2x32xf32> to vector<2x32xbf16>
    %cst_29 = arith.constant dense<0.000000e+00> : vector<2x128xf32>
    %152 = tpu.matmul %151, %14, %cst_29 {dimension_numbers = #tpu.dot_dimension_numbers<[1], [0], [0], [1], [0, 0, 1, 1], [], []>} : vector<2x32xbf16>, vector<32x128xbf16>, vector<2x128xf32> -> vector<2x128xf32>
    %153 = arith.addf %150, %152 : vector<2x128xf32>
    %154 = arith.negf %153 : vector<2x128xf32>
    %155 = math.exp %154 : vector<2x128xf32>
    %cst_30 = arith.constant 1.000000e+00 : f32
    %156 = vector.broadcast %cst_30 : f32 to vector<2x128xf32>
    %157 = arith.addf %156, %155 : vector<2x128xf32>
    %158 = arith.divf %156, %157 : vector<2x128xf32>
    %159 = vector.extract_strided_slice %158 {offsets = [0, 0], sizes = [2, 32], strides = [1, 1]} : vector<2x128xf32> to vector<2x32xf32>
    %160 = vector.extract_strided_slice %158 {offsets = [0, 32], sizes = [2, 32], strides = [1, 1]} : vector<2x128xf32> to vector<2x32xf32>
    %161 = vector.extract_strided_slice %158 {offsets = [0, 96], sizes = [2, 32], strides = [1, 1]} : vector<2x128xf32> to vector<2x32xf32>
    %162 = vector.extract_strided_slice %153 {offsets = [0, 64], sizes = [2, 32], strides = [1, 1]} : vector<2x128xf32> to vector<2x32xf32>
    %163 = math.tanh %162 : vector<2x32xf32>
    %164 = arith.mulf %160, %147 : vector<2x32xf32>
    %165 = arith.mulf %159, %163 : vector<2x32xf32>
    %166 = arith.addf %164, %165 : vector<2x32xf32>
    %167 = math.tanh %166 : vector<2x32xf32>
    %168 = arith.mulf %161, %167 : vector<2x32xf32>
    %169 = vector.extract_strided_slice %13 {offsets = [16, 0], sizes = [2, 128], strides = [1, 1]} : vector<40x128xf32> to vector<2x128xf32>
    %170 = arith.truncf %168 : vector<2x32xf32> to vector<2x32xbf16>
    %cst_31 = arith.constant dense<0.000000e+00> : vector<2x128xf32>
    %171 = tpu.matmul %170, %14, %cst_31 {dimension_numbers = #tpu.dot_dimension_numbers<[1], [0], [0], [1], [0, 0, 1, 1], [], []>} : vector<2x32xbf16>, vector<32x128xbf16>, vector<2x128xf32> -> vector<2x128xf32>
    %172 = arith.addf %169, %171 : vector<2x128xf32>
    %173 = arith.negf %172 : vector<2x128xf32>
    %174 = math.exp %173 : vector<2x128xf32>
    %cst_32 = arith.constant 1.000000e+00 : f32
    %175 = vector.broadcast %cst_32 : f32 to vector<2x128xf32>
    %176 = arith.addf %175, %174 : vector<2x128xf32>
    %177 = arith.divf %175, %176 : vector<2x128xf32>
    %178 = vector.extract_strided_slice %177 {offsets = [0, 0], sizes = [2, 32], strides = [1, 1]} : vector<2x128xf32> to vector<2x32xf32>
    %179 = vector.extract_strided_slice %177 {offsets = [0, 32], sizes = [2, 32], strides = [1, 1]} : vector<2x128xf32> to vector<2x32xf32>
    %180 = vector.extract_strided_slice %177 {offsets = [0, 96], sizes = [2, 32], strides = [1, 1]} : vector<2x128xf32> to vector<2x32xf32>
    %181 = vector.extract_strided_slice %172 {offsets = [0, 64], sizes = [2, 32], strides = [1, 1]} : vector<2x128xf32> to vector<2x32xf32>
    %182 = math.tanh %181 : vector<2x32xf32>
    %183 = arith.mulf %179, %166 : vector<2x32xf32>
    %184 = arith.mulf %178, %182 : vector<2x32xf32>
    %185 = arith.addf %183, %184 : vector<2x32xf32>
    %186 = math.tanh %185 : vector<2x32xf32>
    %187 = arith.mulf %180, %186 : vector<2x32xf32>
    %188 = vector.extract_strided_slice %13 {offsets = [18, 0], sizes = [2, 128], strides = [1, 1]} : vector<40x128xf32> to vector<2x128xf32>
    %189 = arith.truncf %187 : vector<2x32xf32> to vector<2x32xbf16>
    %cst_33 = arith.constant dense<0.000000e+00> : vector<2x128xf32>
    %190 = tpu.matmul %189, %14, %cst_33 {dimension_numbers = #tpu.dot_dimension_numbers<[1], [0], [0], [1], [0, 0, 1, 1], [], []>} : vector<2x32xbf16>, vector<32x128xbf16>, vector<2x128xf32> -> vector<2x128xf32>
    %191 = arith.addf %188, %190 : vector<2x128xf32>
    %192 = arith.negf %191 : vector<2x128xf32>
    %193 = math.exp %192 : vector<2x128xf32>
    %cst_34 = arith.constant 1.000000e+00 : f32
    %194 = vector.broadcast %cst_34 : f32 to vector<2x128xf32>
    %195 = arith.addf %194, %193 : vector<2x128xf32>
    %196 = arith.divf %194, %195 : vector<2x128xf32>
    %197 = vector.extract_strided_slice %196 {offsets = [0, 0], sizes = [2, 32], strides = [1, 1]} : vector<2x128xf32> to vector<2x32xf32>
    %198 = vector.extract_strided_slice %196 {offsets = [0, 32], sizes = [2, 32], strides = [1, 1]} : vector<2x128xf32> to vector<2x32xf32>
    %199 = vector.extract_strided_slice %196 {offsets = [0, 96], sizes = [2, 32], strides = [1, 1]} : vector<2x128xf32> to vector<2x32xf32>
    %200 = vector.extract_strided_slice %191 {offsets = [0, 64], sizes = [2, 32], strides = [1, 1]} : vector<2x128xf32> to vector<2x32xf32>
    %201 = math.tanh %200 : vector<2x32xf32>
    %202 = arith.mulf %198, %185 : vector<2x32xf32>
    %203 = arith.mulf %197, %201 : vector<2x32xf32>
    %204 = arith.addf %202, %203 : vector<2x32xf32>
    %205 = math.tanh %204 : vector<2x32xf32>
    %206 = arith.mulf %199, %205 : vector<2x32xf32>
    %207 = vector.extract_strided_slice %13 {offsets = [20, 0], sizes = [2, 128], strides = [1, 1]} : vector<40x128xf32> to vector<2x128xf32>
    %208 = arith.truncf %206 : vector<2x32xf32> to vector<2x32xbf16>
    %cst_35 = arith.constant dense<0.000000e+00> : vector<2x128xf32>
    %209 = tpu.matmul %208, %14, %cst_35 {dimension_numbers = #tpu.dot_dimension_numbers<[1], [0], [0], [1], [0, 0, 1, 1], [], []>} : vector<2x32xbf16>, vector<32x128xbf16>, vector<2x128xf32> -> vector<2x128xf32>
    %210 = arith.addf %207, %209 : vector<2x128xf32>
    %211 = arith.negf %210 : vector<2x128xf32>
    %212 = math.exp %211 : vector<2x128xf32>
    %cst_36 = arith.constant 1.000000e+00 : f32
    %213 = vector.broadcast %cst_36 : f32 to vector<2x128xf32>
    %214 = arith.addf %213, %212 : vector<2x128xf32>
    %215 = arith.divf %213, %214 : vector<2x128xf32>
    %216 = vector.extract_strided_slice %215 {offsets = [0, 0], sizes = [2, 32], strides = [1, 1]} : vector<2x128xf32> to vector<2x32xf32>
    %217 = vector.extract_strided_slice %215 {offsets = [0, 32], sizes = [2, 32], strides = [1, 1]} : vector<2x128xf32> to vector<2x32xf32>
    %218 = vector.extract_strided_slice %215 {offsets = [0, 96], sizes = [2, 32], strides = [1, 1]} : vector<2x128xf32> to vector<2x32xf32>
    %219 = vector.extract_strided_slice %210 {offsets = [0, 64], sizes = [2, 32], strides = [1, 1]} : vector<2x128xf32> to vector<2x32xf32>
    %220 = math.tanh %219 : vector<2x32xf32>
    %221 = arith.mulf %217, %204 : vector<2x32xf32>
    %222 = arith.mulf %216, %220 : vector<2x32xf32>
    %223 = arith.addf %221, %222 : vector<2x32xf32>
    %224 = math.tanh %223 : vector<2x32xf32>
    %225 = arith.mulf %218, %224 : vector<2x32xf32>
    %226 = vector.extract_strided_slice %13 {offsets = [22, 0], sizes = [2, 128], strides = [1, 1]} : vector<40x128xf32> to vector<2x128xf32>
    %227 = arith.truncf %225 : vector<2x32xf32> to vector<2x32xbf16>
    %cst_37 = arith.constant dense<0.000000e+00> : vector<2x128xf32>
    %228 = tpu.matmul %227, %14, %cst_37 {dimension_numbers = #tpu.dot_dimension_numbers<[1], [0], [0], [1], [0, 0, 1, 1], [], []>} : vector<2x32xbf16>, vector<32x128xbf16>, vector<2x128xf32> -> vector<2x128xf32>
    %229 = arith.addf %226, %228 : vector<2x128xf32>
    %230 = arith.negf %229 : vector<2x128xf32>
    %231 = math.exp %230 : vector<2x128xf32>
    %cst_38 = arith.constant 1.000000e+00 : f32
    %232 = vector.broadcast %cst_38 : f32 to vector<2x128xf32>
    %233 = arith.addf %232, %231 : vector<2x128xf32>
    %234 = arith.divf %232, %233 : vector<2x128xf32>
    %235 = vector.extract_strided_slice %234 {offsets = [0, 0], sizes = [2, 32], strides = [1, 1]} : vector<2x128xf32> to vector<2x32xf32>
    %236 = vector.extract_strided_slice %234 {offsets = [0, 32], sizes = [2, 32], strides = [1, 1]} : vector<2x128xf32> to vector<2x32xf32>
    %237 = vector.extract_strided_slice %234 {offsets = [0, 96], sizes = [2, 32], strides = [1, 1]} : vector<2x128xf32> to vector<2x32xf32>
    %238 = vector.extract_strided_slice %229 {offsets = [0, 64], sizes = [2, 32], strides = [1, 1]} : vector<2x128xf32> to vector<2x32xf32>
    %239 = math.tanh %238 : vector<2x32xf32>
    %240 = arith.mulf %236, %223 : vector<2x32xf32>
    %241 = arith.mulf %235, %239 : vector<2x32xf32>
    %242 = arith.addf %240, %241 : vector<2x32xf32>
    %243 = math.tanh %242 : vector<2x32xf32>
    %244 = arith.mulf %237, %243 : vector<2x32xf32>
    %245 = vector.extract_strided_slice %13 {offsets = [24, 0], sizes = [2, 128], strides = [1, 1]} : vector<40x128xf32> to vector<2x128xf32>
    %246 = arith.truncf %244 : vector<2x32xf32> to vector<2x32xbf16>
    %cst_39 = arith.constant dense<0.000000e+00> : vector<2x128xf32>
    %247 = tpu.matmul %246, %14, %cst_39 {dimension_numbers = #tpu.dot_dimension_numbers<[1], [0], [0], [1], [0, 0, 1, 1], [], []>} : vector<2x32xbf16>, vector<32x128xbf16>, vector<2x128xf32> -> vector<2x128xf32>
    %248 = arith.addf %245, %247 : vector<2x128xf32>
    %249 = arith.negf %248 : vector<2x128xf32>
    %250 = math.exp %249 : vector<2x128xf32>
    %cst_40 = arith.constant 1.000000e+00 : f32
    %251 = vector.broadcast %cst_40 : f32 to vector<2x128xf32>
    %252 = arith.addf %251, %250 : vector<2x128xf32>
    %253 = arith.divf %251, %252 : vector<2x128xf32>
    %254 = vector.extract_strided_slice %253 {offsets = [0, 0], sizes = [2, 32], strides = [1, 1]} : vector<2x128xf32> to vector<2x32xf32>
    %255 = vector.extract_strided_slice %253 {offsets = [0, 32], sizes = [2, 32], strides = [1, 1]} : vector<2x128xf32> to vector<2x32xf32>
    %256 = vector.extract_strided_slice %253 {offsets = [0, 96], sizes = [2, 32], strides = [1, 1]} : vector<2x128xf32> to vector<2x32xf32>
    %257 = vector.extract_strided_slice %248 {offsets = [0, 64], sizes = [2, 32], strides = [1, 1]} : vector<2x128xf32> to vector<2x32xf32>
    %258 = math.tanh %257 : vector<2x32xf32>
    %259 = arith.mulf %255, %242 : vector<2x32xf32>
    %260 = arith.mulf %254, %258 : vector<2x32xf32>
    %261 = arith.addf %259, %260 : vector<2x32xf32>
    %262 = math.tanh %261 : vector<2x32xf32>
    %263 = arith.mulf %256, %262 : vector<2x32xf32>
    %264 = vector.extract_strided_slice %13 {offsets = [26, 0], sizes = [2, 128], strides = [1, 1]} : vector<40x128xf32> to vector<2x128xf32>
    %265 = arith.truncf %263 : vector<2x32xf32> to vector<2x32xbf16>
    %cst_41 = arith.constant dense<0.000000e+00> : vector<2x128xf32>
    %266 = tpu.matmul %265, %14, %cst_41 {dimension_numbers = #tpu.dot_dimension_numbers<[1], [0], [0], [1], [0, 0, 1, 1], [], []>} : vector<2x32xbf16>, vector<32x128xbf16>, vector<2x128xf32> -> vector<2x128xf32>
    %267 = arith.addf %264, %266 : vector<2x128xf32>
    %268 = arith.negf %267 : vector<2x128xf32>
    %269 = math.exp %268 : vector<2x128xf32>
    %cst_42 = arith.constant 1.000000e+00 : f32
    %270 = vector.broadcast %cst_42 : f32 to vector<2x128xf32>
    %271 = arith.addf %270, %269 : vector<2x128xf32>
    %272 = arith.divf %270, %271 : vector<2x128xf32>
    %273 = vector.extract_strided_slice %272 {offsets = [0, 0], sizes = [2, 32], strides = [1, 1]} : vector<2x128xf32> to vector<2x32xf32>
    %274 = vector.extract_strided_slice %272 {offsets = [0, 32], sizes = [2, 32], strides = [1, 1]} : vector<2x128xf32> to vector<2x32xf32>
    %275 = vector.extract_strided_slice %272 {offsets = [0, 96], sizes = [2, 32], strides = [1, 1]} : vector<2x128xf32> to vector<2x32xf32>
    %276 = vector.extract_strided_slice %267 {offsets = [0, 64], sizes = [2, 32], strides = [1, 1]} : vector<2x128xf32> to vector<2x32xf32>
    %277 = math.tanh %276 : vector<2x32xf32>
    %278 = arith.mulf %274, %261 : vector<2x32xf32>
    %279 = arith.mulf %273, %277 : vector<2x32xf32>
    %280 = arith.addf %278, %279 : vector<2x32xf32>
    %281 = math.tanh %280 : vector<2x32xf32>
    %282 = arith.mulf %275, %281 : vector<2x32xf32>
    %283 = vector.extract_strided_slice %13 {offsets = [28, 0], sizes = [2, 128], strides = [1, 1]} : vector<40x128xf32> to vector<2x128xf32>
    %284 = arith.truncf %282 : vector<2x32xf32> to vector<2x32xbf16>
    %cst_43 = arith.constant dense<0.000000e+00> : vector<2x128xf32>
    %285 = tpu.matmul %284, %14, %cst_43 {dimension_numbers = #tpu.dot_dimension_numbers<[1], [0], [0], [1], [0, 0, 1, 1], [], []>} : vector<2x32xbf16>, vector<32x128xbf16>, vector<2x128xf32> -> vector<2x128xf32>
    %286 = arith.addf %283, %285 : vector<2x128xf32>
    %287 = arith.negf %286 : vector<2x128xf32>
    %288 = math.exp %287 : vector<2x128xf32>
    %cst_44 = arith.constant 1.000000e+00 : f32
    %289 = vector.broadcast %cst_44 : f32 to vector<2x128xf32>
    %290 = arith.addf %289, %288 : vector<2x128xf32>
    %291 = arith.divf %289, %290 : vector<2x128xf32>
    %292 = vector.extract_strided_slice %291 {offsets = [0, 0], sizes = [2, 32], strides = [1, 1]} : vector<2x128xf32> to vector<2x32xf32>
    %293 = vector.extract_strided_slice %291 {offsets = [0, 32], sizes = [2, 32], strides = [1, 1]} : vector<2x128xf32> to vector<2x32xf32>
    %294 = vector.extract_strided_slice %291 {offsets = [0, 96], sizes = [2, 32], strides = [1, 1]} : vector<2x128xf32> to vector<2x32xf32>
    %295 = vector.extract_strided_slice %286 {offsets = [0, 64], sizes = [2, 32], strides = [1, 1]} : vector<2x128xf32> to vector<2x32xf32>
    %296 = math.tanh %295 : vector<2x32xf32>
    %297 = arith.mulf %293, %280 : vector<2x32xf32>
    %298 = arith.mulf %292, %296 : vector<2x32xf32>
    %299 = arith.addf %297, %298 : vector<2x32xf32>
    %300 = math.tanh %299 : vector<2x32xf32>
    %301 = arith.mulf %294, %300 : vector<2x32xf32>
    %302 = vector.extract_strided_slice %13 {offsets = [30, 0], sizes = [2, 128], strides = [1, 1]} : vector<40x128xf32> to vector<2x128xf32>
    %303 = arith.truncf %301 : vector<2x32xf32> to vector<2x32xbf16>
    %cst_45 = arith.constant dense<0.000000e+00> : vector<2x128xf32>
    %304 = tpu.matmul %303, %14, %cst_45 {dimension_numbers = #tpu.dot_dimension_numbers<[1], [0], [0], [1], [0, 0, 1, 1], [], []>} : vector<2x32xbf16>, vector<32x128xbf16>, vector<2x128xf32> -> vector<2x128xf32>
    %305 = arith.addf %302, %304 : vector<2x128xf32>
    %306 = arith.negf %305 : vector<2x128xf32>
    %307 = math.exp %306 : vector<2x128xf32>
    %cst_46 = arith.constant 1.000000e+00 : f32
    %308 = vector.broadcast %cst_46 : f32 to vector<2x128xf32>
    %309 = arith.addf %308, %307 : vector<2x128xf32>
    %310 = arith.divf %308, %309 : vector<2x128xf32>
    %311 = vector.extract_strided_slice %310 {offsets = [0, 0], sizes = [2, 32], strides = [1, 1]} : vector<2x128xf32> to vector<2x32xf32>
    %312 = vector.extract_strided_slice %310 {offsets = [0, 32], sizes = [2, 32], strides = [1, 1]} : vector<2x128xf32> to vector<2x32xf32>
    %313 = vector.extract_strided_slice %310 {offsets = [0, 96], sizes = [2, 32], strides = [1, 1]} : vector<2x128xf32> to vector<2x32xf32>
    %314 = vector.extract_strided_slice %305 {offsets = [0, 64], sizes = [2, 32], strides = [1, 1]} : vector<2x128xf32> to vector<2x32xf32>
    %315 = math.tanh %314 : vector<2x32xf32>
    %316 = arith.mulf %312, %299 : vector<2x32xf32>
    %317 = arith.mulf %311, %315 : vector<2x32xf32>
    %318 = arith.addf %316, %317 : vector<2x32xf32>
    %319 = math.tanh %318 : vector<2x32xf32>
    %320 = arith.mulf %313, %319 : vector<2x32xf32>
    %321 = vector.extract_strided_slice %13 {offsets = [32, 0], sizes = [2, 128], strides = [1, 1]} : vector<40x128xf32> to vector<2x128xf32>
    %322 = arith.truncf %320 : vector<2x32xf32> to vector<2x32xbf16>
    %cst_47 = arith.constant dense<0.000000e+00> : vector<2x128xf32>
    %323 = tpu.matmul %322, %14, %cst_47 {dimension_numbers = #tpu.dot_dimension_numbers<[1], [0], [0], [1], [0, 0, 1, 1], [], []>} : vector<2x32xbf16>, vector<32x128xbf16>, vector<2x128xf32> -> vector<2x128xf32>
    %324 = arith.addf %321, %323 : vector<2x128xf32>
    %325 = arith.negf %324 : vector<2x128xf32>
    %326 = math.exp %325 : vector<2x128xf32>
    %cst_48 = arith.constant 1.000000e+00 : f32
    %327 = vector.broadcast %cst_48 : f32 to vector<2x128xf32>
    %328 = arith.addf %327, %326 : vector<2x128xf32>
    %329 = arith.divf %327, %328 : vector<2x128xf32>
    %330 = vector.extract_strided_slice %329 {offsets = [0, 0], sizes = [2, 32], strides = [1, 1]} : vector<2x128xf32> to vector<2x32xf32>
    %331 = vector.extract_strided_slice %329 {offsets = [0, 32], sizes = [2, 32], strides = [1, 1]} : vector<2x128xf32> to vector<2x32xf32>
    %332 = vector.extract_strided_slice %329 {offsets = [0, 96], sizes = [2, 32], strides = [1, 1]} : vector<2x128xf32> to vector<2x32xf32>
    %333 = vector.extract_strided_slice %324 {offsets = [0, 64], sizes = [2, 32], strides = [1, 1]} : vector<2x128xf32> to vector<2x32xf32>
    %334 = math.tanh %333 : vector<2x32xf32>
    %335 = arith.mulf %331, %318 : vector<2x32xf32>
    %336 = arith.mulf %330, %334 : vector<2x32xf32>
    %337 = arith.addf %335, %336 : vector<2x32xf32>
    %338 = math.tanh %337 : vector<2x32xf32>
    %339 = arith.mulf %332, %338 : vector<2x32xf32>
    %340 = vector.extract_strided_slice %13 {offsets = [34, 0], sizes = [2, 128], strides = [1, 1]} : vector<40x128xf32> to vector<2x128xf32>
    %341 = arith.truncf %339 : vector<2x32xf32> to vector<2x32xbf16>
    %cst_49 = arith.constant dense<0.000000e+00> : vector<2x128xf32>
    %342 = tpu.matmul %341, %14, %cst_49 {dimension_numbers = #tpu.dot_dimension_numbers<[1], [0], [0], [1], [0, 0, 1, 1], [], []>} : vector<2x32xbf16>, vector<32x128xbf16>, vector<2x128xf32> -> vector<2x128xf32>
    %343 = arith.addf %340, %342 : vector<2x128xf32>
    %344 = arith.negf %343 : vector<2x128xf32>
    %345 = math.exp %344 : vector<2x128xf32>
    %cst_50 = arith.constant 1.000000e+00 : f32
    %346 = vector.broadcast %cst_50 : f32 to vector<2x128xf32>
    %347 = arith.addf %346, %345 : vector<2x128xf32>
    %348 = arith.divf %346, %347 : vector<2x128xf32>
    %349 = vector.extract_strided_slice %348 {offsets = [0, 0], sizes = [2, 32], strides = [1, 1]} : vector<2x128xf32> to vector<2x32xf32>
    %350 = vector.extract_strided_slice %348 {offsets = [0, 32], sizes = [2, 32], strides = [1, 1]} : vector<2x128xf32> to vector<2x32xf32>
    %351 = vector.extract_strided_slice %348 {offsets = [0, 96], sizes = [2, 32], strides = [1, 1]} : vector<2x128xf32> to vector<2x32xf32>
    %352 = vector.extract_strided_slice %343 {offsets = [0, 64], sizes = [2, 32], strides = [1, 1]} : vector<2x128xf32> to vector<2x32xf32>
    %353 = math.tanh %352 : vector<2x32xf32>
    %354 = arith.mulf %350, %337 : vector<2x32xf32>
    %355 = arith.mulf %349, %353 : vector<2x32xf32>
    %356 = arith.addf %354, %355 : vector<2x32xf32>
    %357 = math.tanh %356 : vector<2x32xf32>
    %358 = arith.mulf %351, %357 : vector<2x32xf32>
    %359 = vector.extract_strided_slice %13 {offsets = [36, 0], sizes = [2, 128], strides = [1, 1]} : vector<40x128xf32> to vector<2x128xf32>
    %360 = arith.truncf %358 : vector<2x32xf32> to vector<2x32xbf16>
    %cst_51 = arith.constant dense<0.000000e+00> : vector<2x128xf32>
    %361 = tpu.matmul %360, %14, %cst_51 {dimension_numbers = #tpu.dot_dimension_numbers<[1], [0], [0], [1], [0, 0, 1, 1], [], []>} : vector<2x32xbf16>, vector<32x128xbf16>, vector<2x128xf32> -> vector<2x128xf32>
    %362 = arith.addf %359, %361 : vector<2x128xf32>
    %363 = arith.negf %362 : vector<2x128xf32>
    %364 = math.exp %363 : vector<2x128xf32>
    %cst_52 = arith.constant 1.000000e+00 : f32
    %365 = vector.broadcast %cst_52 : f32 to vector<2x128xf32>
    %366 = arith.addf %365, %364 : vector<2x128xf32>
    %367 = arith.divf %365, %366 : vector<2x128xf32>
    %368 = vector.extract_strided_slice %367 {offsets = [0, 0], sizes = [2, 32], strides = [1, 1]} : vector<2x128xf32> to vector<2x32xf32>
    %369 = vector.extract_strided_slice %367 {offsets = [0, 32], sizes = [2, 32], strides = [1, 1]} : vector<2x128xf32> to vector<2x32xf32>
    %370 = vector.extract_strided_slice %367 {offsets = [0, 96], sizes = [2, 32], strides = [1, 1]} : vector<2x128xf32> to vector<2x32xf32>
    %371 = vector.extract_strided_slice %362 {offsets = [0, 64], sizes = [2, 32], strides = [1, 1]} : vector<2x128xf32> to vector<2x32xf32>
    %372 = math.tanh %371 : vector<2x32xf32>
    %373 = arith.mulf %369, %356 : vector<2x32xf32>
    %374 = arith.mulf %368, %372 : vector<2x32xf32>
    %375 = arith.addf %373, %374 : vector<2x32xf32>
    %376 = math.tanh %375 : vector<2x32xf32>
    %377 = arith.mulf %370, %376 : vector<2x32xf32>
    %378 = vector.extract_strided_slice %13 {offsets = [38, 0], sizes = [2, 128], strides = [1, 1]} : vector<40x128xf32> to vector<2x128xf32>
    %379 = arith.truncf %377 : vector<2x32xf32> to vector<2x32xbf16>
    %cst_53 = arith.constant dense<0.000000e+00> : vector<2x128xf32>
    %380 = tpu.matmul %379, %14, %cst_53 {dimension_numbers = #tpu.dot_dimension_numbers<[1], [0], [0], [1], [0, 0, 1, 1], [], []>} : vector<2x32xbf16>, vector<32x128xbf16>, vector<2x128xf32> -> vector<2x128xf32>
    %381 = arith.addf %378, %380 : vector<2x128xf32>
    %382 = arith.negf %381 : vector<2x128xf32>
    %383 = math.exp %382 : vector<2x128xf32>
    %cst_54 = arith.constant 1.000000e+00 : f32
    %384 = vector.broadcast %cst_54 : f32 to vector<2x128xf32>
    %385 = arith.addf %384, %383 : vector<2x128xf32>
    %386 = arith.divf %384, %385 : vector<2x128xf32>
    %387 = vector.extract_strided_slice %386 {offsets = [0, 0], sizes = [2, 32], strides = [1, 1]} : vector<2x128xf32> to vector<2x32xf32>
    %388 = vector.extract_strided_slice %386 {offsets = [0, 32], sizes = [2, 32], strides = [1, 1]} : vector<2x128xf32> to vector<2x32xf32>
    %389 = vector.extract_strided_slice %386 {offsets = [0, 96], sizes = [2, 32], strides = [1, 1]} : vector<2x128xf32> to vector<2x32xf32>
    %390 = vector.extract_strided_slice %381 {offsets = [0, 64], sizes = [2, 32], strides = [1, 1]} : vector<2x128xf32> to vector<2x32xf32>
    %391 = math.tanh %390 : vector<2x32xf32>
    %392 = arith.mulf %388, %375 : vector<2x32xf32>
    %393 = arith.mulf %387, %391 : vector<2x32xf32>
    %394 = arith.addf %392, %393 : vector<2x32xf32>
    %395 = math.tanh %394 : vector<2x32xf32>
    %396 = arith.mulf %389, %395 : vector<2x32xf32>
    %397 = arith.truncf %396 : vector<2x32xf32> to vector<2x32xbf16>
    %c0_55 = arith.constant 0 : index
    %c0_56 = arith.constant 0 : index
    %398 = vector.load %arg6[%c0_55, %c0_56] : memref<32x128xbf16, #tpu.memory_space<vmem>>, vector<32x128xbf16>
    %cst_57 = arith.constant dense<0.000000e+00> : vector<2x128xf32>
    %399 = tpu.matmul %397, %398, %cst_57 {dimension_numbers = #tpu.dot_dimension_numbers<[1], [0], [0], [1], [0, 0, 1, 1], [], []>} : vector<2x32xbf16>, vector<32x128xbf16>, vector<2x128xf32> -> vector<2x128xf32>
    %c0_58 = arith.constant 0 : index
    %c0_59 = arith.constant 0 : index
    %400 = vector.load %arg7[%c0_58, %c0_59] : memref<1x128xf32, #tpu.memory_space<vmem>>, vector<1x128xf32>
    %401 = vector.broadcast %400 : vector<1x128xf32> to vector<2x128xf32>
    %402 = arith.addf %399, %401 : vector<2x128xf32>
    %c0_60 = arith.constant 0 : index
    %c0_61 = arith.constant 0 : index
    %403 = vector.load %arg8[%c0_60, %c0_61] : memref<2x128xf32, #tpu.memory_space<vmem>>, vector<2x128xf32>
    tpu.vector_store %arg8[%c0_60, %c0_61], %402 {strides = array<i32>} : memref<2x128xf32, #tpu.memory_space<vmem>>, vector<2x128xf32>,
    return
  }
}

</mosaic_0001>

<llo_original>
// kernel: forward.1
$region0: #{forward.1}
  #allocation0 [shape = 'u32[]', space=smem, size = 0x4, offset = 0x4, fixed_abs, tag = 'smem constant byte address 0x4 - core index']
  #allocation1 [shape = 'u32[144,128]{1,0:T(1,128)}', space=vmem, size = 0x12000, scoped, tag = 'internal scratch']
  %s0 = inlined_call_operand.vmem [shape: bf16[40,64], index: 0, kind: input, shape index: {}]
  %s1 = inlined_call_operand.vmem [shape: bf16[64,128], index: 1, kind: input, shape index: {}]
  %s2 = inlined_call_operand.vmem [shape: f32[1,128], index: 2, kind: input, shape index: {}]
  %s3 = inlined_call_operand.vmem [shape: bf16[128,128], index: 3, kind: input, shape index: {}]
  %s4 = inlined_call_operand.vmem [shape: bf16[32,128], index: 4, kind: input, shape index: {}]
  %s5 = inlined_call_operand.vmem [shape: f32[1,128], index: 5, kind: input, shape index: {}]
  %s6 = inlined_call_operand.vmem [shape: bf16[32,128], index: 6, kind: input, shape index: {}]
  %s7 = inlined_call_operand.vmem [shape: f32[1,128], index: 7, kind: input, shape index: {}]
  %s8 = inlined_call_operand.hbm [shape: f32[2,128], index: 8, kind: output, shape index: {}]
  %s9 = sld [smem:[#allocation0]]
  $region42: #{forward.1} parent=0
    _
  %s11 = ssub.s32 1, %s9
  %s12 = scalar_select 0, %s11, %s9
  $region1: #{forward.1} parent=0
    #allocation2 [shape = 'u8[1024]{0}', space=vmem, size = 0x400, scoped, tag = 'output window, operand 0, single buffered']
    #allocation3 [shape = 's32[1]{0}', space=sflag, size = 0x4, scoped, tag = 'scoped memory for forward.1']
    %13 = vsyncpa [#allocation3], 0
    // Predicated region
    $region2: #{forward.1} parent=1 // pred_check
      _
    $region3: #{forward.1} parent=1 // pred_check_branch
      %15 = sbr.rel (0) target = $region5
    $region4: #{forward.1} parent=1 // pred_region
      _
    $region5: #{forward.1} parent=1 // pred_fallthru
      _
    // Predicated region
    $region6: #{forward.1} parent=1 // pred_check
      _
    $region7: #{forward.1} parent=1 // pred_check_branch
      %17 = sbr.rel (0) target = $region9
    $region8: #{forward.1} parent=1 // pred_region
      _
    $region9: #{forward.1} parent=1 // pred_fallthru
      _
    // Predicated region
    $region10: #{forward.1} parent=1 // pred_check
      _
    $region11: #{forward.1} parent=1 // pred_check_branch
      %19 = sbr.rel (0) target = $region13
    $region12: #{forward.1} parent=1 // pred_region
      _
    $region13: #{forward.1} parent=1 // pred_fallthru
      _
    // Predicated region
    $region14: #{forward.1} parent=1 // pred_check
      _
    $region15: #{forward.1} parent=1 // pred_check_branch
      %21 = sbr.rel (0) target = $region17
    $region16: #{forward.1} parent=1 // pred_region
      _
    $region17: #{forward.1} parent=1 // pred_fallthru
      _
    // Predicated region
    $region18: #{forward.1} parent=1 // pred_check
      _
    $region19: #{forward.1} parent=1 // pred_check_branch
      %23 = sbr.rel (0) target = $region21
    $region20: #{forward.1} parent=1 // pred_region
      _
    $region21: #{forward.1} parent=1 // pred_fallthru
      _
    // Predicated region
    $region22: #{forward.1} parent=1 // pred_check
      _
    $region23: #{forward.1} parent=1 // pred_check_branch
      %25 = sbr.rel (0) target = $region25
    $region24: #{forward.1} parent=1 // pred_region
      _
    $region25: #{forward.1} parent=1 // pred_fallthru
      _
    // Predicated region
    $region26: #{forward.1} parent=1 // pred_check
      _
    $region27: #{forward.1} parent=1 // pred_check_branch
      %27 = sbr.rel (0) target = $region29
    $region28: #{forward.1} parent=1 // pred_region
      _
    $region29: #{forward.1} parent=1 // pred_fallthru
      _
    // Predicated region
    $region30: #{forward.1} parent=1 // pred_check
      _
    $region31: #{forward.1} parent=1 // pred_check_branch
      %29 = sbr.rel (0) target = $region33
    $region32: #{forward.1} parent=1 // pred_region
      _
    $region33: #{forward.1} parent=1 // pred_fallthru
      _
    %v31 = vld [vmem:[%s0] sm:$0xf]
    %v32 = vld [vmem:[%s0 + $0x4] sm:$0xf]
    %v33 = vld [vmem:[%s0 + $0x8] sm:$0xf]
    %v34 = vld [vmem:[%s0 + $0xc] sm:$0xf]
    %v35 = vld [vmem:[%s0 + $0x10] sm:$0xf]
    %v36 = vld [vmem:[%s1] sm:$0xf]
    %v37 = vld [vmem:[%s1 + $0x4] sm:$0xf]
    %v38 = vld [vmem:[%s1 + $0x8] sm:$0xf]
    %v39 = vld [vmem:[%s1 + $0xc] sm:$0xf]
    %v40 = vld [vmem:[%s1 + $0x10] sm:$0xf]
    %v41 = vld [vmem:[%s1 + $0x14] sm:$0xf]
    %v42 = vld [vmem:[%s1 + $0x18] sm:$0xf]
    %v43 = vld [vmem:[%s1 + $0x1c] sm:$0xf]
    %v44 = vld [vmem:[%s2] sm:$0x1]
    %v46 = vlaneseq
    %v47 = vshrl.u32 %v46, 7
    %v48 = vsub.s32 0, %v47
    %v49 = vrot.slane %v44, %v48
    %v56 = vunpack.c.l.b16 %v31
    %v57 = vunpack.c.l.b16 %v32
    %v58 = vunpack.c.l.b16 %v33
    %v59 = vunpack.c.l.b16 %v34
    %v60 = vunpack.c.l.b16 %v35
    %v61 = vpack.c.b16 %v57, %v56
    %v62 = vpack.c.b16 %v59, %v58
    %v63 = vpack.c.b16 %v60, %v60
    %v72 = vunpack.c.l.b16 %v36
    %v73 = vunpack.c.l.b16 %v37
    %v74 = vunpack.c.l.b16 %v38
    %v75 = vunpack.c.l.b16 %v39
    %v76 = vunpack.c.l.b16 %v40
    %v77 = vunpack.c.l.b16 %v41
    %v78 = vunpack.c.l.b16 %v42
    %v79 = vunpack.c.l.b16 %v43
    %v80 = vpack.c.b16 %v73, %v72
    %v81 = vpack.c.b16 %v75, %v74
    %v82 = vpack.c.b16 %v77, %v76
    %v83 = vpack.c.b16 %v79, %v78
    %vm88 = vcmask 523264
    %v90 = vsel %vm88, %v61, 0
    %v93 = vsel %vm88, %v62, 0
    %v96 = vsel %vm88, %v63, 0
    %98 = vmatprep.subr.bf16.mxu0 0
    %99 = vmatpush1.bf16.msra.mxu0 %v80
    %100 = vmatprep.subr.bf16.mxu0 0
    %101 = vmatpush1.bf16.msra.mxu0 %v81
    %102 = vmatprep.subr.bf16.mxu0 0
    %103 = vmatpush1.bf16.msra.mxu0 %v82
    %104 = vmatprep.subr.bf16.mxu0 0
    %105 = vmatpush1.bf16.msra.mxu0 %v83
    %106 = vmatprep.subr.bf16.mxu0 0
    %107 = vmatpush1.bf16.msra.mxu0 0
    %108 = vmatprep.subr.bf16.mxu0 0
    %109 = vmatpush1.bf16.msra.mxu0 0
    %110 = vmatprep.subr.bf16.mxu0 0
    %111 = vmatpush1.bf16.msra.mxu0 0
    %112 = vmatprep.subr.bf16.mxu0 0
    %113 = vmatpush1.bf16.msra.mxu0 0
    %114 = vmatprep.subr.bf16.mxu0 0
    %115 = vmatpush1.bf16.msra.mxu0 0
    %116 = vmatprep.subr.bf16.mxu0 0
    %117 = vmatpush1.bf16.msra.mxu0 0
    %118 = vmatprep.subr.bf16.mxu0 0
    %119 = vmatpush1.bf16.msra.mxu0 0
    %120 = vmatprep.subr.bf16.mxu0 0
    %121 = vmatpush1.bf16.msra.mxu0 0
    %122 = vmatprep.subr.bf16.mxu0 0
    %123 = vmatpush1.bf16.msra.mxu0 0
    %124 = vmatprep.subr.bf16.mxu0 0
    %125 = vmatpush1.bf16.msra.mxu0 0
    %126 = vmatprep.subr.bf16.mxu0 0
    %127 = vmatpush1.bf16.msra.mxu0 0
    %128 = vmatprep.subr.bf16.mxu0 0
    %129 = vmatpush1.bf16.msra.mxu0 0
    %130 = vmatprep.mubr.bf16.mxu0 0
    %131 = vmatmul.mubr.bf16.gmra.mrb[0].mxu0 %v90
    %v132 = vpop.f32.mrb[0].mxu0
    %v133 = vadd.f32 %v49, %v132
    %v134 = vpop.f32.mrb[0].mxu0
    %v135 = vpop.f32.mrb[0].mxu0
    %v136 = vadd.f32 %v49, %v135
    %v137 = vpop.f32.mrb[0].mxu0
    %138 = vmatprep.mubr.bf16.mxu0 0
    %139 = vmatmul.mubr.bf16.gmra.mrb[0].mxu0 %v93
    %v140 = vpop.f32.mrb[0].mxu0
    %v141 = vadd.f32 %v49, %v140
    %v142 = vpop.f32.mrb[0].mxu0
    %v143 = vpop.f32.mrb[0].mxu0
    %v144 = vadd.f32 %v49, %v143
    %v145 = vpop.f32.mrb[0].mxu0
    %146 = vmatprep.mubr.bf16.mxu0 0
    %147 = vmatmul.mubr.bf16.gmra.mrb[0].mxu0 %v96
    %v148 = vpop.f32.mrb[0].mxu0
    %v149 = vadd.f32 %v49, %v148
    %v150 = vpop.f32.mrb[0].mxu0
    %v151 = vpop.f32.mrb[0].mxu0
    %v152 = vpop.f32.mrb[0].mxu0
    %153 = vdwg.mxu0
    %v154 = vmax.f32 %v133, 0.0
    %v155 = vmax.f32 %v136, 0.0
    %v156 = vmax.f32 %v141, 0.0
    %v157 = vmax.f32 %v144, 0.0
    %v158 = vmax.f32 %v149, 0.0
    %v159 = vpack.c.bf16 %v155, %v154
    %v160 = vpack.c.bf16 %v157, %v156
    %v161 = vpack.c.bf16 %v158, %v158
    %v162 = vld [vmem:[%s3] sm:$0xf]
    %v163 = vld [vmem:[%s3 + $0x4] sm:$0xf]
    %v164 = vld [vmem:[%s3 + $0x8] sm:$0xf]
    %v165 = vld [vmem:[%s3 + $0xc] sm:$0xf]
    %v166 = vld [vmem:[%s3 + $0x10] sm:$0xf]
    %v167 = vld [vmem:[%s3 + $0x14] sm:$0xf]
    %v168 = vld [vmem:[%s3 + $0x18] sm:$0xf]
    %v169 = vld [vmem:[%s3 + $0x1c] sm:$0xf]
    %v170 = vld [vmem:[%s3 + $0x20] sm:$0xf]
    %v171 = vld [vmem:[%s3 + $0x24] sm:$0xf]
    %v172 = vld [vmem:[%s3 + $0x28] sm:$0xf]
    %v173 = vld [vmem:[%s3 + $0x2c] sm:$0xf]
    %v174 = vld [vmem:[%s3 + $0x30] sm:$0xf]
    %v175 = vld [vmem:[%s3 + $0x34] sm:$0xf]
    %v176 = vld [vmem:[%s3 + $0x38] sm:$0xf]
    %v177 = vld [vmem:[%s3 + $0x3c] sm:$0xf]
    %v178 = vld [vmem:[%s5] sm:$0x1]
    %v180 = vlaneseq
    %v181 = vshrl.u32 %v180, 7
    %v182 = vsub.s32 0, %v181
    %v183 = vrot.slane %v178, %v182
    %v201 = vunpack.c.l.b16 %v162
    %v202 = vunpack.c.l.b16 %v163
    %v203 = vunpack.c.l.b16 %v164
    %v204 = vunpack.c.l.b16 %v165
    %v205 = vunpack.c.l.b16 %v166
    %v206 = vunpack.c.l.b16 %v167
    %v207 = vunpack.c.l.b16 %v168
    %v208 = vunpack.c.l.b16 %v169
    %v209 = vunpack.c.l.b16 %v170
    %v210 = vunpack.c.l.b16 %v171
    %v211 = vunpack.c.l.b16 %v172
    %v212 = vunpack.c.l.b16 %v173
    %v213 = vunpack.c.l.b16 %v174
    %v214 = vunpack.c.l.b16 %v175
    %v215 = vunpack.c.l.b16 %v176
    %v216 = vunpack.c.l.b16 %v177
    %v217 = vpack.c.b16 %v202, %v201
    %v218 = vpack.c.b16 %v204, %v203
    %v219 = vpack.c.b16 %v206, %v205
    %v220 = vpack.c.b16 %v208, %v207
    %v221 = vpack.c.b16 %v210, %v209
    %v222 = vpack.c.b16 %v212, %v211
    %v223 = vpack.c.b16 %v214, %v213
    %v224 = vpack.c.b16 %v216, %v215
    %233 = vmatprep.subr.bf16.mxu0 0
    %234 = vmatpush1.bf16.msra.mxu0 %v217
    %235 = vmatprep.subr.bf16.mxu0 0
    %236 = vmatpush1.bf16.msra.mxu0 %v218
    %237 = vmatprep.subr.bf16.mxu0 0
    %238 = vmatpush1.bf16.msra.mxu0 %v219
    %239 = vmatprep.subr.bf16.mxu0 0
    %240 = vmatpush1.bf16.msra.mxu0 %v220
    %241 = vmatprep.subr.bf16.mxu0 0
    %242 = vmatpush1.bf16.msra.mxu0 %v221
    %243 = vmatprep.subr.bf16.mxu0 0
    %244 = vmatpush1.bf16.msra.mxu0 %v222
    %245 = vmatprep.subr.bf16.mxu0 0
    %246 = vmatpush1.bf16.msra.mxu0 %v223
    %247 = vmatprep.subr.bf16.mxu0 0
    %248 = vmatpush1.bf16.msra.mxu0 %v224
    %249 = vmatprep.subr.bf16.mxu0 0
    %250 = vmatpush1.bf16.msra.mxu0 0
    %251 = vmatprep.subr.bf16.mxu0 0
    %252 = vmatpush1.bf16.msra.mxu0 0
    %253 = vmatprep.subr.bf16.mxu0 0
    %254 = vmatpush1.bf16.msra.mxu0 0
    %255 = vmatprep.subr.bf16.mxu0 0
    %256 = vmatpush1.bf16.msra.mxu0 0
    %257 = vmatprep.subr.bf16.mxu0 0
    %258 = vmatpush1.bf16.msra.mxu0 0
    %259 = vmatprep.subr.bf16.mxu0 0
    %260 = vmatpush1.bf16.msra.mxu0 0
    %261 = vmatprep.subr.bf16.mxu0 0
    %262 = vmatpush1.bf16.msra.mxu0 0
    %263 = vmatprep.subr.bf16.mxu0 0
    %264 = vmatpush1.bf16.msra.mxu0 0
    %265 = vmatprep.mubr.bf16.mxu0 0
    %266 = vmatmul.mubr.bf16.gmra.mrb[0].mxu0 %v159
    %v267 = vpop.f32.mrb[0].mxu0
    %v268 = vadd.f32 %v183, %v267
    %v269 = vpop.f32.mrb[0].mxu0
    %v270 = vpop.f32.mrb[0].mxu0
    %v271 = vadd.f32 %v183, %v270
    %v272 = vpop.f32.mrb[0].mxu0
    %273 = vmatprep.mubr.bf16.mxu0 0
    %274 = vmatmul.mubr.bf16.gmra.mrb[0].mxu0 %v160
    %v275 = vpop.f32.mrb[0].mxu0
    %v276 = vadd.f32 %v183, %v275
    %v277 = vpop.f32.mrb[0].mxu0
    %v278 = vpop.f32.mrb[0].mxu0
    %v279 = vadd.f32 %v183, %v278
    %v280 = vpop.f32.mrb[0].mxu0
    %281 = vmatprep.mubr.bf16.mxu0 0
    %282 = vmatmul.mubr.bf16.gmra.mrb[0].mxu0 %v161
    %v283 = vpop.f32.mrb[0].mxu0
    %v284 = vadd.f32 %v183, %v283
    %v285 = vpop.f32.mrb[0].mxu0
    %v286 = vpop.f32.mrb[0].mxu0
    %v287 = vpop.f32.mrb[0].mxu0
    %288 = vdwg.mxu0
    %v289 = vld [vmem:[%s4] sm:$0xf]
    %v290 = vld [vmem:[%s4 + $0x4] sm:$0xf]
    %v291 = vld [vmem:[%s4 + $0x8] sm:$0xf]
    %v292 = vld [vmem:[%s4 + $0xc] sm:$0xf]
    %v297 = vunpack.c.l.b16 %v289
    %v298 = vunpack.c.l.b16 %v290
    %v299 = vunpack.c.l.b16 %v291
    %v300 = vunpack.c.l.b16 %v292
    %v301 = vpack.c.b16 %v298, %v297
    %v302 = vpack.c.b16 %v300, %v299
    %vm305 = vcmask 261120
    %v307 = vsel %vm305, 0, 0
    %309 = vmatprep.subr.bf16.mxu0 0
    %310 = vmatpush1.bf16.msra.mxu0 %v301
    %311 = vmatprep.subr.bf16.mxu0 0
    %312 = vmatpush1.bf16.msra.mxu0 %v302
    %313 = vmatprep.subr.bf16.mxu0 0
    %314 = vmatpush1.bf16.msra.mxu0 0
    %315 = vmatprep.subr.bf16.mxu0 0
    %316 = vmatpush1.bf16.msra.mxu0 0
    %317 = vmatprep.subr.bf16.mxu0 0
    %318 = vmatpush1.bf16.msra.mxu0 0
    %319 = vmatprep.subr.bf16.mxu0 0
    %320 = vmatpush1.bf16.msra.mxu0 0
    %321 = vmatprep.subr.bf16.mxu0 0
    %322 = vmatpush1.bf16.msra.mxu0 0
    %323 = vmatprep.subr.bf16.mxu0 0
    %324 = vmatpush1.bf16.msra.mxu0 0
    %325 = vmatprep.subr.bf16.mxu0 0
    %326 = vmatpush1.bf16.msra.mxu0 0
    %327 = vmatprep.subr.bf16.mxu0 0
    %328 = vmatpush1.bf16.msra.mxu0 0
    %329 = vmatprep.subr.bf16.mxu0 0
    %330 = vmatpush1.bf16.msra.mxu0 0
    %331 = vmatprep.subr.bf16.mxu0 0
    %332 = vmatpush1.bf16.msra.mxu0 0
    %333 = vmatprep.subr.bf16.mxu0 0
    %334 = vmatpush1.bf16.msra.mxu0 0
    %335 = vmatprep.subr.bf16.mxu0 0
    %336 = vmatpush1.bf16.msra.mxu0 0
    %337 = vmatprep.subr.bf16.mxu0 0
    %338 = vmatpush1.bf16.msra.mxu0 0
    %339 = vmatprep.subr.bf16.mxu0 0
    %340 = vmatpush1.bf16.msra.mxu0 0
    %341 = vmatprep.mubr.bf16.mxu0 0
    %342 = vmatmul.mubr.bf16.gmra.mrb[0].mxu0 %v307
    %v343 = vpop.f32.mrb[0].mxu0
    %v344 = vadd.f32 0.0, %v343
    %v345 = vpop.f32.mrb[0].mxu0
    %v346 = vpop.f32.mrb[0].mxu0
    %v347 = vpop.f32.mrb[0].mxu0
    %348 = vdwg.mxu0
    %v349 = vadd.f32 %v268, %v344
    %v350 = vxor.u32 %v349, 2147483648
    %v351 = vmul.f32 %v350, 1.442695
    %v352 = vpow.pop %v351
    %v353 = vadd.f32 %v352, 1.0
    %v354 = vrcp.pop %v353
    %v355 = vmul.f32 1.0, %v354
    %v356 = vtanh.pop %v349
    %v357 = vmul.f32 %v355, 0.0
    %359 = vrot.lane.b32.xlu0 %v356, 64
    %v360 = vpop.permute.xlu0 %359
    %v362 = vmul.f32 %v355, %v360
    %364 = vrot.lane.b32.xlu0 %v362, 32
    %v365 = vpop.permute.xlu0 %364
    %v367 = vadd.f32 %v357, %v365
    %v368 = vtanh.pop %v367
    %370 = vrot.lane.b32.xlu0 %v368, 64
    %v371 = vpop.permute.xlu0 %370
    %v373 = vmul.f32 %v355, %v371
    %v374 = vpack.c.bf16 %v373, %v373
    %376 = vrot.lane.b32.xlu0 %v374, 32
    %v377 = vpop.permute.xlu0 %376
    %v379 = vsel %vm305, %v377, 0
    %381 = vmatprep.subr.bf16.mxu0 0
    %382 = vmatpush1.bf16.msra.mxu0 %v301
    %383 = vmatprep.subr.bf16.mxu0 0
    %384 = vmatpush1.bf16.msra.mxu0 %v302
    %385 = vmatprep.subr.bf16.mxu0 0
    %386 = vmatpush1.bf16.msra.mxu0 0
    %387 = vmatprep.subr.bf16.mxu0 0
    %388 = vmatpush1.bf16.msra.mxu0 0
    %389 = vmatprep.subr.bf16.mxu0 0
    %390 = vmatpush1.bf16.msra.mxu0 0
    %391 = vmatprep.subr.bf16.mxu0 0
    %392 = vmatpush1.bf16.msra.mxu0 0
    %393 = vmatprep.subr.bf16.mxu0 0
    %394 = vmatpush1.bf16.msra.mxu0 0
    %395 = vmatprep.subr.bf16.mxu0 0
    %396 = vmatpush1.bf16.msra.mxu0 0
    %397 = vmatprep.subr.bf16.mxu0 0
    %398 = vmatpush1.bf16.msra.mxu0 0
    %399 = vmatprep.subr.bf16.mxu0 0
    %400 = vmatpush1.bf16.msra.mxu0 0
    %401 = vmatprep.subr.bf16.mxu0 0
    %402 = vmatpush1.bf16.msra.mxu0 0
    %403 = vmatprep.subr.bf16.mxu0 0
    %404 = vmatpush1.bf16.msra.mxu0 0
    %405 = vmatprep.subr.bf16.mxu0 0
    %406 = vmatpush1.bf16.msra.mxu0 0
    %407 = vmatprep.subr.bf16.mxu0 0
    %408 = vmatpush1.bf16.msra.mxu0 0
    %409 = vmatprep.subr.bf16.mxu0 0
    %410 = vmatpush1.bf16.msra.mxu0 0
    %411 = vmatprep.subr.bf16.mxu0 0
    %412 = vmatpush1.bf16.msra.mxu0 0
    %413 = vmatprep.mubr.bf16.mxu0 0
    %414 = vmatmul.mubr.bf16.gmra.mrb[0].mxu0 %v379
    %v415 = vpop.f32.mrb[0].mxu0
    %v416 = vadd.f32 0.0, %v415
    %v417 = vpop.f32.mrb[0].mxu0
    %v418 = vpop.f32.mrb[0].mxu0
    %v419 = vpop.f32.mrb[0].mxu0
    %420 = vdwg.mxu0
    %v422 = vrot.slane %v416, 6
    %v424 = vadd.f32 %v268, %v422
    %v425 = vxor.u32 %v424, 2147483648
    %v426 = vmul.f32 %v425, 1.442695
    %v427 = vpow.pop %v426
    %v428 = vadd.f32 %v427, 1.0
    %v429 = vrcp.pop %v428
    %v430 = vmul.f32 1.0, %v429
    %v431 = vtanh.pop %v424
    %v433 = vrot.slane %v367, 6
    %v435 = vmul.f32 %v430, %v433
    %437 = vrot.lane.b32.xlu0 %v431, 64
    %v438 = vpop.permute.xlu0 %437
    %v440 = vmul.f32 %v430, %v438
    %442 = vrot.lane.b32.xlu0 %v440, 32
    %v443 = vpop.permute.xlu0 %442
    %v445 = vadd.f32 %v435, %v443
    %v446 = vtanh.pop %v445
    %448 = vrot.lane.b32.xlu0 %v446, 64
    %v449 = vpop.permute.xlu0 %448
    %v451 = vmul.f32 %v430, %v449
    %v452 = vpack.c.bf16 %v451, %v451
    %v454 = vrot.slane %v452, 1
    %455 = vrot.lane.b32.xlu0 %v454, 32
    %v456 = vpop.permute.xlu0 %455
    %v458 = vsel %vm305, %v456, 0
    %460 = vmatprep.subr.bf16.mxu0 0
    %461 = vmatpush1.bf16.msra.mxu0 %v301
    %462 = vmatprep.subr.bf16.mxu0 0
    %463 = vmatpush1.bf16.msra.mxu0 %v302
    %464 = vmatprep.subr.bf16.mxu0 0
    %465 = vmatpush1.bf16.msra.mxu0 0
    %466 = vmatprep.subr.bf16.mxu0 0
    %467 = vmatpush1.bf16.msra.mxu0 0
    %468 = vmatprep.subr.bf16.mxu0 0
    %469 = vmatpush1.bf16.msra.mxu0 0
    %470 = vmatprep.subr.bf16.mxu0 0
    %471 = vmatpush1.bf16.msra.mxu0 0
    %472 = vmatprep.subr.bf16.mxu0 0
    %473 = vmatpush1.bf16.msra.mxu0 0
    %474 = vmatprep.subr.bf16.mxu0 0
    %475 = vmatpush1.bf16.msra.mxu0 0
    %476 = vmatprep.subr.bf16.mxu0 0
    %477 = vmatpush1.bf16.msra.mxu0 0
    %478 = vmatprep.subr.bf16.mxu0 0
    %479 = vmatpush1.bf16.msra.mxu0 0
    %480 = vmatprep.subr.bf16.mxu0 0
    %481 = vmatpush1.bf16.msra.mxu0 0
    %482 = vmatprep.subr.bf16.mxu0 0
    %483 = vmatpush1.bf16.msra.mxu0 0
    %484 = vmatprep.subr.bf16.mxu0 0
    %485 = vmatpush1.bf16.msra.mxu0 0
    %486 = vmatprep.subr.bf16.mxu0 0
    %487 = vmatpush1.bf16.msra.mxu0 0
    %488 = vmatprep.subr.bf16.mxu0 0
    %489 = vmatpush1.bf16.msra.mxu0 0
    %490 = vmatprep.subr.bf16.mxu0 0
    %491 = vmatpush1.bf16.msra.mxu0 0
    %492 = vmatprep.mubr.bf16.mxu0 0
    %493 = vmatmul.mubr.bf16.gmra.mrb[0].mxu0 %v458
    %v494 = vpop.f32.mrb[0].mxu0
    %v495 = vadd.f32 0.0, %v494
    %v496 = vpop.f32.mrb[0].mxu0
    %v497 = vpop.f32.mrb[0].mxu0
    %v498 = vpop.f32.mrb[0].mxu0
    %499 = vdwg.mxu0
    %v501 = vrot.slane %v495, 4
    %v503 = vadd.f32 %v268, %v501
    %v504 = vxor.u32 %v503, 2147483648
    %v505 = vmul.f32 %v504, 1.442695
    %v506 = vpow.pop %v505
    %v507 = vadd.f32 %v506, 1.0
    %v508 = vrcp.pop %v507
    %v509 = vmul.f32 1.0, %v508
    %v510 = vtanh.pop %v503
    %v512 = vrot.slane %v445, 6
    %v514 = vmul.f32 %v509, %v512
    %516 = vrot.lane.b32.xlu0 %v510, 64
    %v517 = vpop.permute.xlu0 %516
    %v519 = vmul.f32 %v509, %v517
    %521 = vrot.lane.b32.xlu0 %v519, 32
    %v522 = vpop.permute.xlu0 %521
    %v524 = vadd.f32 %v514, %v522
    %v525 = vtanh.pop %v524
    %527 = vrot.lane.b32.xlu0 %v525, 64
    %v528 = vpop.permute.xlu0 %527
    %v530 = vmul.f32 %v509, %v528
    %v531 = vpack.c.bf16 %v530, %v530
    %v533 = vrot.slane %v531, 2
    %534 = vrot.lane.b32.xlu0 %v533, 32
    %v535 = vpop.permute.xlu0 %534
    %v537 = vsel %vm305, %v535, 0
    %539 = vmatprep.subr.bf16.mxu0 0
    %540 = vmatpush1.bf16.msra.mxu0 %v301
    %541 = vmatprep.subr.bf16.mxu0 0
    %542 = vmatpush1.bf16.msra.mxu0 %v302
    %543 = vmatprep.subr.bf16.mxu0 0
    %544 = vmatpush1.bf16.msra.mxu0 0
    %545 = vmatprep.subr.bf16.mxu0 0
    %546 = vmatpush1.bf16.msra.mxu0 0
    %547 = vmatprep.subr.bf16.mxu0 0
    %548 = vmatpush1.bf16.msra.mxu0 0
    %549 = vmatprep.subr.bf16.mxu0 0
    %550 = vmatpush1.bf16.msra.mxu0 0
    %551 = vmatprep.subr.bf16.mxu0 0
    %552 = vmatpush1.bf16.msra.mxu0 0
    %553 = vmatprep.subr.bf16.mxu0 0
    %554 = vmatpush1.bf16.msra.mxu0 0
    %555 = vmatprep.subr.bf16.mxu0 0
    %556 = vmatpush1.bf16.msra.mxu0 0
    %557 = vmatprep.subr.bf16.mxu0 0
    %558 = vmatpush1.bf16.msra.mxu0 0
    %559 = vmatprep.subr.bf16.mxu0 0
    %560 = vmatpush1.bf16.msra.mxu0 0
    %561 = vmatprep.subr.bf16.mxu0 0
    %562 = vmatpush1.bf16.msra.mxu0 0
    %563 = vmatprep.subr.bf16.mxu0 0
    %564 = vmatpush1.bf16.msra.mxu0 0
    %565 = vmatprep.subr.bf16.mxu0 0
    %566 = vmatpush1.bf16.msra.mxu0 0
    %567 = vmatprep.subr.bf16.mxu0 0
    %568 = vmatpush1.bf16.msra.mxu0 0
    %569 = vmatprep.subr.bf16.mxu0 0
    %570 = vmatpush1.bf16.msra.mxu0 0
    %571 = vmatprep.mubr.bf16.mxu0 0
    %572 = vmatmul.mubr.bf16.gmra.mrb[0].mxu0 %v537
    %v573 = vpop.f32.mrb[0].mxu0
    %v574 = vadd.f32 0.0, %v573
    %v575 = vpop.f32.mrb[0].mxu0
    %v576 = vpop.f32.mrb[0].mxu0
    %v577 = vpop.f32.mrb[0].mxu0
    %578 = vdwg.mxu0
    %v580 = vrot.slane %v574, 2
    %v582 = vadd.f32 %v268, %v580
    %v583 = vxor.u32 %v582, 2147483648
    %v584 = vmul.f32 %v583, 1.442695
    %v585 = vpow.pop %v584
    %v586 = vadd.f32 %v585, 1.0
    %v587 = vrcp.pop %v586
    %v588 = vmul.f32 1.0, %v587
    %v589 = vtanh.pop %v582
    %v591 = vrot.slane %v524, 6
    %v593 = vmul.f32 %v588, %v591
    %595 = vrot.lane.b32.xlu0 %v589, 64
    %v596 = vpop.permute.xlu0 %595
    %v598 = vmul.f32 %v588, %v596
    %600 = vrot.lane.b32.xlu0 %v598, 32
    %v601 = vpop.permute.xlu0 %600
    %v603 = vadd.f32 %v593, %v601
    %v604 = vtanh.pop %v603
    %606 = vrot.lane.b32.xlu0 %v604, 64
    %v607 = vpop.permute.xlu0 %606
    %v609 = vmul.f32 %v588, %v607
    %v610 = vpack.c.bf16 %v609, %v609
    %v612 = vrot.slane %v610, 3
    %613 = vrot.lane.b32.xlu0 %v612, 32
    %v614 = vpop.permute.xlu0 %613
    %v616 = vsel %vm305, %v614, 0
    %618 = vmatprep.subr.bf16.mxu0 0
    %619 = vmatpush1.bf16.msra.mxu0 %v301
    %620 = vmatprep.subr.bf16.mxu0 0
    %621 = vmatpush1.bf16.msra.mxu0 %v302
    %622 = vmatprep.subr.bf16.mxu0 0
    %623 = vmatpush1.bf16.msra.mxu0 0
    %624 = vmatprep.subr.bf16.mxu0 0
    %625 = vmatpush1.bf16.msra.mxu0 0
    %626 = vmatprep.subr.bf16.mxu0 0
    %627 = vmatpush1.bf16.msra.mxu0 0
    %628 = vmatprep.subr.bf16.mxu0 0
    %629 = vmatpush1.bf16.msra.mxu0 0
    %630 = vmatprep.subr.bf16.mxu0 0
    %631 = vmatpush1.bf16.msra.mxu0 0
    %632 = vmatprep.subr.bf16.mxu0 0
    %633 = vmatpush1.bf16.msra.mxu0 0
    %634 = vmatprep.subr.bf16.mxu0 0
    %635 = vmatpush1.bf16.msra.mxu0 0
    %636 = vmatprep.subr.bf16.mxu0 0
    %637 = vmatpush1.bf16.msra.mxu0 0
    %638 = vmatprep.subr.bf16.mxu0 0
    %639 = vmatpush1.bf16.msra.mxu0 0
    %640 = vmatprep.subr.bf16.mxu0 0
    %641 = vmatpush1.bf16.msra.mxu0 0
    %642 = vmatprep.subr.bf16.mxu0 0
    %643 = vmatpush1.bf16.msra.mxu0 0
    %644 = vmatprep.subr.bf16.mxu0 0
    %645 = vmatpush1.bf16.msra.mxu0 0
    %646 = vmatprep.subr.bf16.mxu0 0
    %647 = vmatpush1.bf16.msra.mxu0 0
    %648 = vmatprep.subr.bf16.mxu0 0
    %649 = vmatpush1.bf16.msra.mxu0 0
    %650 = vmatprep.mubr.bf16.mxu0 0
    %651 = vmatmul.mubr.bf16.gmra.mrb[0].mxu0 %v616
    %v652 = vpop.f32.mrb[0].mxu0
    %v653 = vadd.f32 0.0, %v652
    %v654 = vpop.f32.mrb[0].mxu0
    %v655 = vpop.f32.mrb[0].mxu0
    %v656 = vpop.f32.mrb[0].mxu0
    %657 = vdwg.mxu0
    %v658 = vadd.f32 %v271, %v653
    %v659 = vxor.u32 %v658, 2147483648
    %v660 = vmul.f32 %v659, 1.442695
    %v661 = vpow.pop %v660
    %v662 = vadd.f32 %v661, 1.0
    %v663 = vrcp.pop %v662
    %v664 = vmul.f32 1.0, %v663
    %v665 = vtanh.pop %v658
    %v667 = vrot.slane %v603, 6
    %v669 = vmul.f32 %v664, %v667
    %671 = vrot.lane.b32.xlu0 %v665, 64
    %v672 = vpop.permute.xlu0 %671
    %v674 = vmul.f32 %v664, %v672
    %676 = vrot.lane.b32.xlu0 %v674, 32
    %v677 = vpop.permute.xlu0 %676
    %v679 = vadd.f32 %v669, %v677
    %v680 = vtanh.pop %v679
    %682 = vrot.lane.b32.xlu0 %v680, 64
    %v683 = vpop.permute.xlu0 %682
    %v685 = vmul.f32 %v664, %v683
    %v686 = vpack.c.bf16 %v685, %v685
    %688 = vrot.lane.b32.xlu0 %v686, 32
    %v689 = vpop.permute.xlu0 %688
    %v691 = vsel %vm305, %v689, 0
    %693 = vmatprep.subr.bf16.mxu0 0
    %694 = vmatpush1.bf16.msra.mxu0 %v301
    %695 = vmatprep.subr.bf16.mxu0 0
    %696 = vmatpush1.bf16.msra.mxu0 %v302
    %697 = vmatprep.subr.bf16.mxu0 0
    %698 = vmatpush1.bf16.msra.mxu0 0
    %699 = vmatprep.subr.bf16.mxu0 0
    %700 = vmatpush1.bf16.msra.mxu0 0
    %701 = vmatprep.subr.bf16.mxu0 0
    %702 = vmatpush1.bf16.msra.mxu0 0
    %703 = vmatprep.subr.bf16.mxu0 0
    %704 = vmatpush1.bf16.msra.mxu0 0
    %705 = vmatprep.subr.bf16.mxu0 0
    %706 = vmatpush1.bf16.msra.mxu0 0
    %707 = vmatprep.subr.bf16.mxu0 0
    %708 = vmatpush1.bf16.msra.mxu0 0
    %709 = vmatprep.subr.bf16.mxu0 0
    %710 = vmatpush1.bf16.msra.mxu0 0
    %711 = vmatprep.subr.bf16.mxu0 0
    %712 = vmatpush1.bf16.msra.mxu0 0
    %713 = vmatprep.subr.bf16.mxu0 0
    %714 = vmatpush1.bf16.msra.mxu0 0
    %715 = vmatprep.subr.bf16.mxu0 0
    %716 = vmatpush1.bf16.msra.mxu0 0
    %717 = vmatprep.subr.bf16.mxu0 0
    %718 = vmatpush1.bf16.msra.mxu0 0
    %719 = vmatprep.subr.bf16.mxu0 0
    %720 = vmatpush1.bf16.msra.mxu0 0
    %721 = vmatprep.subr.bf16.mxu0 0
    %722 = vmatpush1.bf16.msra.mxu0 0
    %723 = vmatprep.subr.bf16.mxu0 0
    %724 = vmatpush1.bf16.msra.mxu0 0
    %725 = vmatprep.mubr.bf16.mxu0 0
    %726 = vmatmul.mubr.bf16.gmra.mrb[0].mxu0 %v691
    %v727 = vpop.f32.mrb[0].mxu0
    %v728 = vadd.f32 0.0, %v727
    %v729 = vpop.f32.mrb[0].mxu0
    %v730 = vpop.f32.mrb[0].mxu0
    %v731 = vpop.f32.mrb[0].mxu0
    %732 = vdwg.mxu0
    %v734 = vrot.slane %v728, 6
    %v736 = vadd.f32 %v271, %v734
    %v737 = vxor.u32 %v736, 2147483648
    %v738 = vmul.f32 %v737, 1.442695
    %v739 = vpow.pop %v738
    %v740 = vadd.f32 %v739, 1.0
    %v741 = vrcp.pop %v740
    %v742 = vmul.f32 1.0, %v741
    %v743 = vtanh.pop %v736
    %v745 = vrot.slane %v679, 6
    %v747 = vmul.f32 %v742, %v745
    %749 = vrot.lane.b32.xlu0 %v743, 64
    %v750 = vpop.permute.xlu0 %749
    %v752 = vmul.f32 %v742, %v750
    %754 = vrot.lane.b32.xlu0 %v752, 32
    %v755 = vpop.permute.xlu0 %754
    %v757 = vadd.f32 %v747, %v755
    %v758 = vtanh.pop %v757
    %760 = vrot.lane.b32.xlu0 %v758, 64
    %v761 = vpop.permute.xlu0 %760
    %v763 = vmul.f32 %v742, %v761
    %v764 = vpack.c.bf16 %v763, %v763
    %v766 = vrot.slane %v764, 1
    %767 = vrot.lane.b32.xlu0 %v766, 32
    %v768 = vpop.permute.xlu0 %767
    %v770 = vsel %vm305, %v768, 0
    %772 = vmatprep.subr.bf16.mxu0 0
    %773 = vmatpush1.bf16.msra.mxu0 %v301
    %774 = vmatprep.subr.bf16.mxu0 0
    %775 = vmatpush1.bf16.msra.mxu0 %v302
    %776 = vmatprep.subr.bf16.mxu0 0
    %777 = vmatpush1.bf16.msra.mxu0 0
    %778 = vmatprep.subr.bf16.mxu0 0
    %779 = vmatpush1.bf16.msra.mxu0 0
    %780 = vmatprep.subr.bf16.mxu0 0
    %781 = vmatpush1.bf16.msra.mxu0 0
    %782 = vmatprep.subr.bf16.mxu0 0
    %783 = vmatpush1.bf16.msra.mxu0 0
    %784 = vmatprep.subr.bf16.mxu0 0
    %785 = vmatpush1.bf16.msra.mxu0 0
    %786 = vmatprep.subr.bf16.mxu0 0
    %787 = vmatpush1.bf16.msra.mxu0 0
    %788 = vmatprep.subr.bf16.mxu0 0
    %789 = vmatpush1.bf16.msra.mxu0 0
    %790 = vmatprep.subr.bf16.mxu0 0
    %791 = vmatpush1.bf16.msra.mxu0 0
    %792 = vmatprep.subr.bf16.mxu0 0
    %793 = vmatpush1.bf16.msra.mxu0 0
    %794 = vmatprep.subr.bf16.mxu0 0
    %795 = vmatpush1.bf16.msra.mxu0 0
    %796 = vmatprep.subr.bf16.mxu0 0
    %797 = vmatpush1.bf16.msra.mxu0 0
    %798 = vmatprep.subr.bf16.mxu0 0
    %799 = vmatpush1.bf16.msra.mxu0 0
    %800 = vmatprep.subr.bf16.mxu0 0
    %801 = vmatpush1.bf16.msra.mxu0 0
    %802 = vmatprep.subr.bf16.mxu0 0
    %803 = vmatpush1.bf16.msra.mxu0 0
    %804 = vmatprep.mubr.bf16.mxu0 0
    %805 = vmatmul.mubr.bf16.gmra.mrb[0].mxu0 %v770
    %v806 = vpop.f32.mrb[0].mxu0
    %v807 = vadd.f32 0.0, %v806
    %v808 = vpop.f32.mrb[0].mxu0
    %v809 = vpop.f32.mrb[0].mxu0
    %v810 = vpop.f32.mrb[0].mxu0
    %811 = vdwg.mxu0
    %v813 = vrot.slane %v807, 4
    %v815 = vadd.f32 %v271, %v813
    %v816 = vxor.u32 %v815, 2147483648
    %v817 = vmul.f32 %v816, 1.442695
    %v818 = vpow.pop %v817
    %v819 = vadd.f32 %v818, 1.0
    %v820 = vrcp.pop %v819
    %v821 = vmul.f32 1.0, %v820
    %v822 = vtanh.pop %v815
    %v824 = vrot.slane %v757, 6
    %v826 = vmul.f32 %v821, %v824
    %828 = vrot.lane.b32.xlu0 %v822, 64
    %v829 = vpop.permute.xlu0 %828
    %v831 = vmul.f32 %v821, %v829
    %833 = vrot.lane.b32.xlu0 %v831, 32
    %v834 = vpop.permute.xlu0 %833
    %v836 = vadd.f32 %v826, %v834
    %v837 = vtanh.pop %v836
    %839 = vrot.lane.b32.xlu0 %v837, 64
    %v840 = vpop.permute.xlu0 %839
    %v842 = vmul.f32 %v821, %v840
    %v843 = vpack.c.bf16 %v842, %v842
    %v845 = vrot.slane %v843, 2
    %846 = vrot.lane.b32.xlu0 %v845, 32
    %v847 = vpop.permute.xlu0 %846
    %v849 = vsel %vm305, %v847, 0
    %851 = vmatprep.subr.bf16.mxu0 0
    %852 = vmatpush1.bf16.msra.mxu0 %v301
    %853 = vmatprep.subr.bf16.mxu0 0
    %854 = vmatpush1.bf16.msra.mxu0 %v302
    %855 = vmatprep.subr.bf16.mxu0 0
    %856 = vmatpush1.bf16.msra.mxu0 0
    %857 = vmatprep.subr.bf16.mxu0 0
    %858 = vmatpush1.bf16.msra.mxu0 0
    %859 = vmatprep.subr.bf16.mxu0 0
    %860 = vmatpush1.bf16.msra.mxu0 0
    %861 = vmatprep.subr.bf16.mxu0 0
    %862 = vmatpush1.bf16.msra.mxu0 0
    %863 = vmatprep.subr.bf16.mxu0 0
    %864 = vmatpush1.bf16.msra.mxu0 0
    %865 = vmatprep.subr.bf16.mxu0 0
    %866 = vmatpush1.bf16.msra.mxu0 0
    %867 = vmatprep.subr.bf16.mxu0 0
    %868 = vmatpush1.bf16.msra.mxu0 0
    %869 = vmatprep.subr.bf16.mxu0 0
    %870 = vmatpush1.bf16.msra.mxu0 0
    %871 = vmatprep.subr.bf16.mxu0 0
    %872 = vmatpush1.bf16.msra.mxu0 0
    %873 = vmatprep.subr.bf16.mxu0 0
    %874 = vmatpush1.bf16.msra.mxu0 0
    %875 = vmatprep.subr.bf16.mxu0 0
    %876 = vmatpush1.bf16.msra.mxu0 0
    %877 = vmatprep.subr.bf16.mxu0 0
    %878 = vmatpush1.bf16.msra.mxu0 0
    %879 = vmatprep.subr.bf16.mxu0 0
    %880 = vmatpush1.bf16.msra.mxu0 0
    %881 = vmatprep.subr.bf16.mxu0 0
    %882 = vmatpush1.bf16.msra.mxu0 0
    %883 = vmatprep.mubr.bf16.mxu0 0
    %884 = vmatmul.mubr.bf16.gmra.mrb[0].mxu0 %v849
    %v885 = vpop.f32.mrb[0].mxu0
    %v886 = vadd.f32 0.0, %v885
    %v887 = vpop.f32.mrb[0].mxu0
    %v888 = vpop.f32.mrb[0].mxu0
    %v889 = vpop.f32.mrb[0].mxu0
    %890 = vdwg.mxu0
    %v892 = vrot.slane %v886, 2
    %v894 = vadd.f32 %v271, %v892
    %v895 = vxor.u32 %v894, 2147483648
    %v896 = vmul.f32 %v895, 1.442695
    %v897 = vpow.pop %v896
    %v898 = vadd.f32 %v897, 1.0
    %v899 = vrcp.pop %v898
    %v900 = vmul.f32 1.0, %v899
    %v901 = vtanh.pop %v894
    %v903 = vrot.slane %v836, 6
    %v905 = vmul.f32 %v900, %v903
    %907 = vrot.lane.b32.xlu0 %v901, 64
    %v908 = vpop.permute.xlu0 %907
    %v910 = vmul.f32 %v900, %v908
    %912 = vrot.lane.b32.xlu0 %v910, 32
    %v913 = vpop.permute.xlu0 %912
    %v915 = vadd.f32 %v905, %v913
    %v916 = vtanh.pop %v915
    %918 = vrot.lane.b32.xlu0 %v916, 64
    %v919 = vpop.permute.xlu0 %918
    %v921 = vmul.f32 %v900, %v919
    %v922 = vpack.c.bf16 %v921, %v921
    %v924 = vrot.slane %v922, 3
    %925 = vrot.lane.b32.xlu0 %v924, 32
    %v926 = vpop.permute.xlu0 %925
    %v928 = vsel %vm305, %v926, 0
    %930 = vmatprep.subr.bf16.mxu0 0
    %931 = vmatpush1.bf16.msra.mxu0 %v301
    %932 = vmatprep.subr.bf16.mxu0 0
    %933 = vmatpush1.bf16.msra.mxu0 %v302
    %934 = vmatprep.subr.bf16.mxu0 0
    %935 = vmatpush1.bf16.msra.mxu0 0
    %936 = vmatprep.subr.bf16.mxu0 0
    %937 = vmatpush1.bf16.msra.mxu0 0
    %938 = vmatprep.subr.bf16.mxu0 0
    %939 = vmatpush1.bf16.msra.mxu0 0
    %940 = vmatprep.subr.bf16.mxu0 0
    %941 = vmatpush1.bf16.msra.mxu0 0
    %942 = vmatprep.subr.bf16.mxu0 0
    %943 = vmatpush1.bf16.msra.mxu0 0
    %944 = vmatprep.subr.bf16.mxu0 0
    %945 = vmatpush1.bf16.msra.mxu0 0
    %946 = vmatprep.subr.bf16.mxu0 0
    %947 = vmatpush1.bf16.msra.mxu0 0
    %948 = vmatprep.subr.bf16.mxu0 0
    %949 = vmatpush1.bf16.msra.mxu0 0
    %950 = vmatprep.subr.bf16.mxu0 0
    %951 = vmatpush1.bf16.msra.mxu0 0
    %952 = vmatprep.subr.bf16.mxu0 0
    %953 = vmatpush1.bf16.msra.mxu0 0
    %954 = vmatprep.subr.bf16.mxu0 0
    %955 = vmatpush1.bf16.msra.mxu0 0
    %956 = vmatprep.subr.bf16.mxu0 0
    %957 = vmatpush1.bf16.msra.mxu0 0
    %958 = vmatprep.subr.bf16.mxu0 0
    %959 = vmatpush1.bf16.msra.mxu0 0
    %960 = vmatprep.subr.bf16.mxu0 0
    %961 = vmatpush1.bf16.msra.mxu0 0
    %962 = vmatprep.mubr.bf16.mxu0 0
    %963 = vmatmul.mubr.bf16.gmra.mrb[0].mxu0 %v928
    %v964 = vpop.f32.mrb[0].mxu0
    %v965 = vadd.f32 0.0, %v964
    %v966 = vpop.f32.mrb[0].mxu0
    %v967 = vpop.f32.mrb[0].mxu0
    %v968 = vpop.f32.mrb[0].mxu0
    %969 = vdwg.mxu0
    %v970 = vadd.f32 %v276, %v965
    %v971 = vxor.u32 %v970, 2147483648
    %v972 = vmul.f32 %v971, 1.442695
    %v973 = vpow.pop %v972
    %v974 = vadd.f32 %v973, 1.0
    %v975 = vrcp.pop %v974
    %v976 = vmul.f32 1.0, %v975
    %v977 = vtanh.pop %v970
    %v979 = vrot.slane %v915, 6
    %v981 = vmul.f32 %v976, %v979
    %983 = vrot.lane.b32.xlu0 %v977, 64
    %v984 = vpop.permute.xlu0 %983
    %v986 = vmul.f32 %v976, %v984
    %988 = vrot.lane.b32.xlu0 %v986, 32
    %v989 = vpop.permute.xlu0 %988
    %v991 = vadd.f32 %v981, %v989
    %v992 = vtanh.pop %v991
    %994 = vrot.lane.b32.xlu0 %v992, 64
    %v995 = vpop.permute.xlu0 %994
    %v997 = vmul.f32 %v976, %v995
    %v998 = vpack.c.bf16 %v997, %v997
    %1000 = vrot.lane.b32.xlu0 %v998, 32
    %v1001 = vpop.permute.xlu0 %1000
    %v1003 = vsel %vm305, %v1001, 0
    %1005 = vmatprep.subr.bf16.mxu0 0
    %1006 = vmatpush1.bf16.msra.mxu0 %v301
    %1007 = vmatprep.subr.bf16.mxu0 0
    %1008 = vmatpush1.bf16.msra.mxu0 %v302
    %1009 = vmatprep.subr.bf16.mxu0 0
    %1010 = vmatpush1.bf16.msra.mxu0 0
    %1011 = vmatprep.subr.bf16.mxu0 0
    %1012 = vmatpush1.bf16.msra.mxu0 0
    %1013 = vmatprep.subr.bf16.mxu0 0
    %1014 = vmatpush1.bf16.msra.mxu0 0
    %1015 = vmatprep.subr.bf16.mxu0 0
    %1016 = vmatpush1.bf16.msra.mxu0 0
    %1017 = vmatprep.subr.bf16.mxu0 0
    %1018 = vmatpush1.bf16.msra.mxu0 0
    %1019 = vmatprep.subr.bf16.mxu0 0
    %1020 = vmatpush1.bf16.msra.mxu0 0
    %1021 = vmatprep.subr.bf16.mxu0 0
    %1022 = vmatpush1.bf16.msra.mxu0 0
    %1023 = vmatprep.subr.bf16.mxu0 0
    %1024 = vmatpush1.bf16.msra.mxu0 0
    %1025 = vmatprep.subr.bf16.mxu0 0
    %1026 = vmatpush1.bf16.msra.mxu0 0
    %1027 = vmatprep.subr.bf16.mxu0 0
    %1028 = vmatpush1.bf16.msra.mxu0 0
    %1029 = vmatprep.subr.bf16.mxu0 0
    %1030 = vmatpush1.bf16.msra.mxu0 0
    %1031 = vmatprep.subr.bf16.mxu0 0
    %1032 = vmatpush1.bf16.msra.mxu0 0
    %1033 = vmatprep.subr.bf16.mxu0 0
    %1034 = vmatpush1.bf16.msra.mxu0 0
    %1035 = vmatprep.subr.bf16.mxu0 0
    %1036 = vmatpush1.bf16.msra.mxu0 0
    %1037 = vmatprep.mubr.bf16.mxu0 0
    %1038 = vmatmul.mubr.bf16.gmra.mrb[0].mxu0 %v1003
    %v1039 = vpop.f32.mrb[0].mxu0
    %v1040 = vadd.f32 0.0, %v1039
    %v1041 = vpop.f32.mrb[0].mxu0
    %v1042 = vpop.f32.mrb[0].mxu0
    %v1043 = vpop.f32.mrb[0].mxu0
    %1044 = vdwg.mxu0
    %v1046 = vrot.slane %v1040, 6
    %v1048 = vadd.f32 %v276, %v1046
    %v1049 = vxor.u32 %v1048, 2147483648
    %v1050 = vmul.f32 %v1049, 1.442695
    %v1051 = vpow.pop %v1050
    %v1052 = vadd.f32 %v1051, 1.0
    %v1053 = vrcp.pop %v1052
    %v1054 = vmul.f32 1.0, %v1053
    %v1055 = vtanh.pop %v1048
    %v1057 = vrot.slane %v991, 6
    %v1059 = vmul.f32 %v1054, %v1057
    %1061 = vrot.lane.b32.xlu0 %v1055, 64
    %v1062 = vpop.permute.xlu0 %1061
    %v1064 = vmul.f32 %v1054, %v1062
    %1066 = vrot.lane.b32.xlu0 %v1064, 32
    %v1067 = vpop.permute.xlu0 %1066
    %v1069 = vadd.f32 %v1059, %v1067
    %v1070 = vtanh.pop %v1069
    %1072 = vrot.lane.b32.xlu0 %v1070, 64
    %v1073 = vpop.permute.xlu0 %1072
    %v1075 = vmul.f32 %v1054, %v1073
    %v1076 = vpack.c.bf16 %v1075, %v1075
    %v1078 = vrot.slane %v1076, 1
    %1079 = vrot.lane.b32.xlu0 %v1078, 32
    %v1080 = vpop.permute.xlu0 %1079
    %v1082 = vsel %vm305, %v1080, 0
    %1084 = vmatprep.subr.bf16.mxu0 0
    %1085 = vmatpush1.bf16.msra.mxu0 %v301
    %1086 = vmatprep.subr.bf16.mxu0 0
    %1087 = vmatpush1.bf16.msra.mxu0 %v302
    %1088 = vmatprep.subr.bf16.mxu0 0
    %1089 = vmatpush1.bf16.msra.mxu0 0
    %1090 = vmatprep.subr.bf16.mxu0 0
    %1091 = vmatpush1.bf16.msra.mxu0 0
    %1092 = vmatprep.subr.bf16.mxu0 0
    %1093 = vmatpush1.bf16.msra.mxu0 0
    %1094 = vmatprep.subr.bf16.mxu0 0
    %1095 = vmatpush1.bf16.msra.mxu0 0
    %1096 = vmatprep.subr.bf16.mxu0 0
    %1097 = vmatpush1.bf16.msra.mxu0 0
    %1098 = vmatprep.subr.bf16.mxu0 0
    %1099 = vmatpush1.bf16.msra.mxu0 0
    %1100 = vmatprep.subr.bf16.mxu0 0
    %1101 = vmatpush1.bf16.msra.mxu0 0
    %1102 = vmatprep.subr.bf16.mxu0 0
    %1103 = vmatpush1.bf16.msra.mxu0 0
    %1104 = vmatprep.subr.bf16.mxu0 0
    %1105 = vmatpush1.bf16.msra.mxu0 0
    %1106 = vmatprep.subr.bf16.mxu0 0
    %1107 = vmatpush1.bf16.msra.mxu0 0
    %1108 = vmatprep.subr.bf16.mxu0 0
    %1109 = vmatpush1.bf16.msra.mxu0 0
    %1110 = vmatprep.subr.bf16.mxu0 0
    %1111 = vmatpush1.bf16.msra.mxu0 0
    %1112 = vmatprep.subr.bf16.mxu0 0
    %1113 = vmatpush1.bf16.msra.mxu0 0
    %1114 = vmatprep.subr.bf16.mxu0 0
    %1115 = vmatpush1.bf16.msra.mxu0 0
    %1116 = vmatprep.mubr.bf16.mxu0 0
    %1117 = vmatmul.mubr.bf16.gmra.mrb[0].mxu0 %v1082
    %v1118 = vpop.f32.mrb[0].mxu0
    %v1119 = vadd.f32 0.0, %v1118
    %v1120 = vpop.f32.mrb[0].mxu0
    %v1121 = vpop.f32.mrb[0].mxu0
    %v1122 = vpop.f32.mrb[0].mxu0
    %1123 = vdwg.mxu0
    %v1125 = vrot.slane %v1119, 4
    %v1127 = vadd.f32 %v276, %v1125
    %v1128 = vxor.u32 %v1127, 2147483648
    %v1129 = vmul.f32 %v1128, 1.442695
    %v1130 = vpow.pop %v1129
    %v1131 = vadd.f32 %v1130, 1.0
    %v1132 = vrcp.pop %v1131
    %v1133 = vmul.f32 1.0, %v1132
    %v1134 = vtanh.pop %v1127
    %v1136 = vrot.slane %v1069, 6
    %v1138 = vmul.f32 %v1133, %v1136
    %1140 = vrot.lane.b32.xlu0 %v1134, 64
    %v1141 = vpop.permute.xlu0 %1140
    %v1143 = vmul.f32 %v1133, %v1141
    %1145 = vrot.lane.b32.xlu0 %v1143, 32
    %v1146 = vpop.permute.xlu0 %1145
    %v1148 = vadd.f32 %v1138, %v1146
    %v1149 = vtanh.pop %v1148
    %1151 = vrot.lane.b32.xlu0 %v1149, 64
    %v1152 = vpop.permute.xlu0 %1151
    %v1154 = vmul.f32 %v1133, %v1152
    %v1155 = vpack.c.bf16 %v1154, %v1154
    %v1157 = vrot.slane %v1155, 2
    %1158 = vrot.lane.b32.xlu0 %v1157, 32
    %v1159 = vpop.permute.xlu0 %1158
    %v1161 = vsel %vm305, %v1159, 0
    %1163 = vmatprep.subr.bf16.mxu0 0
    %1164 = vmatpush1.bf16.msra.mxu0 %v301
    %1165 = vmatprep.subr.bf16.mxu0 0
    %1166 = vmatpush1.bf16.msra.mxu0 %v302
    %1167 = vmatprep.subr.bf16.mxu0 0
    %1168 = vmatpush1.bf16.msra.mxu0 0
    %1169 = vmatprep.subr.bf16.mxu0 0
    %1170 = vmatpush1.bf16.msra.mxu0 0
    %1171 = vmatprep.subr.bf16.mxu0 0
    %1172 = vmatpush1.bf16.msra.mxu0 0
    %1173 = vmatprep.subr.bf16.mxu0 0
    %1174 = vmatpush1.bf16.msra.mxu0 0
    %1175 = vmatprep.subr.bf16.mxu0 0
    %1176 = vmatpush1.bf16.msra.mxu0 0
    %1177 = vmatprep.subr.bf16.mxu0 0
    %1178 = vmatpush1.bf16.msra.mxu0 0
    %1179 = vmatprep.subr.bf16.mxu0 0
    %1180 = vmatpush1.bf16.msra.mxu0 0
    %1181 = vmatprep.subr.bf16.mxu0 0
    %1182 = vmatpush1.bf16.msra.mxu0 0
    %1183 = vmatprep.subr.bf16.mxu0 0
    %1184 = vmatpush1.bf16.msra.mxu0 0
    %1185 = vmatprep.subr.bf16.mxu0 0
    %1186 = vmatpush1.bf16.msra.mxu0 0
    %1187 = vmatprep.subr.bf16.mxu0 0
    %1188 = vmatpush1.bf16.msra.mxu0 0
    %1189 = vmatprep.subr.bf16.mxu0 0
    %1190 = vmatpush1.bf16.msra.mxu0 0
    %1191 = vmatprep.subr.bf16.mxu0 0
    %1192 = vmatpush1.bf16.msra.mxu0 0
    %1193 = vmatprep.subr.bf16.mxu0 0
    %1194 = vmatpush1.bf16.msra.mxu0 0
    %1195 = vmatprep.mubr.bf16.mxu0 0
    %1196 = vmatmul.mubr.bf16.gmra.mrb[0].mxu0 %v1161
    %v1197 = vpop.f32.mrb[0].mxu0
    %v1198 = vadd.f32 0.0, %v1197
    %v1199 = vpop.f32.mrb[0].mxu0
    %v1200 = vpop.f32.mrb[0].mxu0
    %v1201 = vpop.f32.mrb[0].mxu0
    %1202 = vdwg.mxu0
    %v1204 = vrot.slane %v1198, 2
    %v1206 = vadd.f32 %v276, %v1204
    %v1207 = vxor.u32 %v1206, 2147483648
    %v1208 = vmul.f32 %v1207, 1.442695
    %v1209 = vpow.pop %v1208
    %v1210 = vadd.f32 %v1209, 1.0
    %v1211 = vrcp.pop %v1210
    %v1212 = vmul.f32 1.0, %v1211
    %v1213 = vtanh.pop %v1206
    %v1215 = vrot.slane %v1148, 6
    %v1217 = vmul.f32 %v1212, %v1215
    %1219 = vrot.lane.b32.xlu0 %v1213, 64
    %v1220 = vpop.permute.xlu0 %1219
    %v1222 = vmul.f32 %v1212, %v1220
    %1224 = vrot.lane.b32.xlu0 %v1222, 32
    %v1225 = vpop.permute.xlu0 %1224
    %v1227 = vadd.f32 %v1217, %v1225
    %v1228 = vtanh.pop %v1227
    %1230 = vrot.lane.b32.xlu0 %v1228, 64
    %v1231 = vpop.permute.xlu0 %1230
    %v1233 = vmul.f32 %v1212, %v1231
    %v1234 = vpack.c.bf16 %v1233, %v1233
    %v1236 = vrot.slane %v1234, 3
    %1237 = vrot.lane.b32.xlu0 %v1236, 32
    %v1238 = vpop.permute.xlu0 %1237
    %v1240 = vsel %vm305, %v1238, 0
    %1242 = vmatprep.subr.bf16.mxu0 0
    %1243 = vmatpush1.bf16.msra.mxu0 %v301
    %1244 = vmatprep.subr.bf16.mxu0 0
    %1245 = vmatpush1.bf16.msra.mxu0 %v302
    %1246 = vmatprep.subr.bf16.mxu0 0
    %1247 = vmatpush1.bf16.msra.mxu0 0
    %1248 = vmatprep.subr.bf16.mxu0 0
    %1249 = vmatpush1.bf16.msra.mxu0 0
    %1250 = vmatprep.subr.bf16.mxu0 0
    %1251 = vmatpush1.bf16.msra.mxu0 0
    %1252 = vmatprep.subr.bf16.mxu0 0
    %1253 = vmatpush1.bf16.msra.mxu0 0
    %1254 = vmatprep.subr.bf16.mxu0 0
    %1255 = vmatpush1.bf16.msra.mxu0 0
    %1256 = vmatprep.subr.bf16.mxu0 0
    %1257 = vmatpush1.bf16.msra.mxu0 0
    %1258 = vmatprep.subr.bf16.mxu0 0
    %1259 = vmatpush1.bf16.msra.mxu0 0
    %1260 = vmatprep.subr.bf16.mxu0 0
    %1261 = vmatpush1.bf16.msra.mxu0 0
    %1262 = vmatprep.subr.bf16.mxu0 0
    %1263 = vmatpush1.bf16.msra.mxu0 0
    %1264 = vmatprep.subr.bf16.mxu0 0
    %1265 = vmatpush1.bf16.msra.mxu0 0
    %1266 = vmatprep.subr.bf16.mxu0 0
    %1267 = vmatpush1.bf16.msra.mxu0 0
    %1268 = vmatprep.subr.bf16.mxu0 0
    %1269 = vmatpush1.bf16.msra.mxu0 0
    %1270 = vmatprep.subr.bf16.mxu0 0
    %1271 = vmatpush1.bf16.msra.mxu0 0
    %1272 = vmatprep.subr.bf16.mxu0 0
    %1273 = vmatpush1.bf16.msra.mxu0 0
    %1274 = vmatprep.mubr.bf16.mxu0 0
    %1275 = vmatmul.mubr.bf16.gmra.mrb[0].mxu0 %v1240
    %v1276 = vpop.f32.mrb[0].mxu0
    %v1277 = vadd.f32 0.0, %v1276
    %v1278 = vpop.f32.mrb[0].mxu0
    %v1279 = vpop.f32.mrb[0].mxu0
    %v1280 = vpop.f32.mrb[0].mxu0
    %1281 = vdwg.mxu0
    %v1282 = vadd.f32 %v279, %v1277
    %v1283 = vxor.u32 %v1282, 2147483648
    %v1284 = vmul.f32 %v1283, 1.442695
    %v1285 = vpow.pop %v1284
    %v1286 = vadd.f32 %v1285, 1.0
    %v1287 = vrcp.pop %v1286
    %v1288 = vmul.f32 1.0, %v1287
    %v1289 = vtanh.pop %v1282
    %v1291 = vrot.slane %v1227, 6
    %v1293 = vmul.f32 %v1288, %v1291
    %1295 = vrot.lane.b32.xlu0 %v1289, 64
    %v1296 = vpop.permute.xlu0 %1295
    %v1298 = vmul.f32 %v1288, %v1296
    %1300 = vrot.lane.b32.xlu0 %v1298, 32
    %v1301 = vpop.permute.xlu0 %1300
    %v1303 = vadd.f32 %v1293, %v1301
    %v1304 = vtanh.pop %v1303
    %1306 = vrot.lane.b32.xlu0 %v1304, 64
    %v1307 = vpop.permute.xlu0 %1306
    %v1309 = vmul.f32 %v1288, %v1307
    %v1310 = vpack.c.bf16 %v1309, %v1309
    %1312 = vrot.lane.b32.xlu0 %v1310, 32
    %v1313 = vpop.permute.xlu0 %1312
    %v1315 = vsel %vm305, %v1313, 0
    %1317 = vmatprep.subr.bf16.mxu0 0
    %1318 = vmatpush1.bf16.msra.mxu0 %v301
    %1319 = vmatprep.subr.bf16.mxu0 0
    %1320 = vmatpush1.bf16.msra.mxu0 %v302
    %1321 = vmatprep.subr.bf16.mxu0 0
    %1322 = vmatpush1.bf16.msra.mxu0 0
    %1323 = vmatprep.subr.bf16.mxu0 0
    %1324 = vmatpush1.bf16.msra.mxu0 0
    %1325 = vmatprep.subr.bf16.mxu0 0
    %1326 = vmatpush1.bf16.msra.mxu0 0
    %1327 = vmatprep.subr.bf16.mxu0 0
    %1328 = vmatpush1.bf16.msra.mxu0 0
    %1329 = vmatprep.subr.bf16.mxu0 0
    %1330 = vmatpush1.bf16.msra.mxu0 0
    %1331 = vmatprep.subr.bf16.mxu0 0
    %1332 = vmatpush1.bf16.msra.mxu0 0
    %1333 = vmatprep.subr.bf16.mxu0 0
    %1334 = vmatpush1.bf16.msra.mxu0 0
    %1335 = vmatprep.subr.bf16.mxu0 0
    %1336 = vmatpush1.bf16.msra.mxu0 0
    %1337 = vmatprep.subr.bf16.mxu0 0
    %1338 = vmatpush1.bf16.msra.mxu0 0
    %1339 = vmatprep.subr.bf16.mxu0 0
    %1340 = vmatpush1.bf16.msra.mxu0 0
    %1341 = vmatprep.subr.bf16.mxu0 0
    %1342 = vmatpush1.bf16.msra.mxu0 0
    %1343 = vmatprep.subr.bf16.mxu0 0
    %1344 = vmatpush1.bf16.msra.mxu0 0
    %1345 = vmatprep.subr.bf16.mxu0 0
    %1346 = vmatpush1.bf16.msra.mxu0 0
    %1347 = vmatprep.subr.bf16.mxu0 0
    %1348 = vmatpush1.bf16.msra.mxu0 0
    %1349 = vmatprep.mubr.bf16.mxu0 0
    %1350 = vmatmul.mubr.bf16.gmra.mrb[0].mxu0 %v1315
    %v1351 = vpop.f32.mrb[0].mxu0
    %v1352 = vadd.f32 0.0, %v1351
    %v1353 = vpop.f32.mrb[0].mxu0
    %v1354 = vpop.f32.mrb[0].mxu0
    %v1355 = vpop.f32.mrb[0].mxu0
    %1356 = vdwg.mxu0
    %v1358 = vrot.slane %v1352, 6
    %v1360 = vadd.f32 %v279, %v1358
    %v1361 = vxor.u32 %v1360, 2147483648
    %v1362 = vmul.f32 %v1361, 1.442695
    %v1363 = vpow.pop %v1362
    %v1364 = vadd.f32 %v1363, 1.0
    %v1365 = vrcp.pop %v1364
    %v1366 = vmul.f32 1.0, %v1365
    %v1367 = vtanh.pop %v1360
    %v1369 = vrot.slane %v1303, 6
    %v1371 = vmul.f32 %v1366, %v1369
    %1373 = vrot.lane.b32.xlu0 %v1367, 64
    %v1374 = vpop.permute.xlu0 %1373
    %v1376 = vmul.f32 %v1366, %v1374
    %1378 = vrot.lane.b32.xlu0 %v1376, 32
    %v1379 = vpop.permute.xlu0 %1378
    %v1381 = vadd.f32 %v1371, %v1379
    %v1382 = vtanh.pop %v1381
    %1384 = vrot.lane.b32.xlu0 %v1382, 64
    %v1385 = vpop.permute.xlu0 %1384
    %v1387 = vmul.f32 %v1366, %v1385
    %v1388 = vpack.c.bf16 %v1387, %v1387
    %v1390 = vrot.slane %v1388, 1
    %1391 = vrot.lane.b32.xlu0 %v1390, 32
    %v1392 = vpop.permute.xlu0 %1391
    %v1394 = vsel %vm305, %v1392, 0
    %1396 = vmatprep.subr.bf16.mxu0 0
    %1397 = vmatpush1.bf16.msra.mxu0 %v301
    %1398 = vmatprep.subr.bf16.mxu0 0
    %1399 = vmatpush1.bf16.msra.mxu0 %v302
    %1400 = vmatprep.subr.bf16.mxu0 0
    %1401 = vmatpush1.bf16.msra.mxu0 0
    %1402 = vmatprep.subr.bf16.mxu0 0
    %1403 = vmatpush1.bf16.msra.mxu0 0
    %1404 = vmatprep.subr.bf16.mxu0 0
    %1405 = vmatpush1.bf16.msra.mxu0 0
    %1406 = vmatprep.subr.bf16.mxu0 0
    %1407 = vmatpush1.bf16.msra.mxu0 0
    %1408 = vmatprep.subr.bf16.mxu0 0
    %1409 = vmatpush1.bf16.msra.mxu0 0
    %1410 = vmatprep.subr.bf16.mxu0 0
    %1411 = vmatpush1.bf16.msra.mxu0 0
    %1412 = vmatprep.subr.bf16.mxu0 0
    %1413 = vmatpush1.bf16.msra.mxu0 0
    %1414 = vmatprep.subr.bf16.mxu0 0
    %1415 = vmatpush1.bf16.msra.mxu0 0
    %1416 = vmatprep.subr.bf16.mxu0 0
    %1417 = vmatpush1.bf16.msra.mxu0 0
    %1418 = vmatprep.subr.bf16.mxu0 0
    %1419 = vmatpush1.bf16.msra.mxu0 0
    %1420 = vmatprep.subr.bf16.mxu0 0
    %1421 = vmatpush1.bf16.msra.mxu0 0
    %1422 = vmatprep.subr.bf16.mxu0 0
    %1423 = vmatpush1.bf16.msra.mxu0 0
    %1424 = vmatprep.subr.bf16.mxu0 0
    %1425 = vmatpush1.bf16.msra.mxu0 0
    %1426 = vmatprep.subr.bf16.mxu0 0
    %1427 = vmatpush1.bf16.msra.mxu0 0
    %1428 = vmatprep.mubr.bf16.mxu0 0
    %1429 = vmatmul.mubr.bf16.gmra.mrb[0].mxu0 %v1394
    %v1430 = vpop.f32.mrb[0].mxu0
    %v1431 = vadd.f32 0.0, %v1430
    %v1432 = vpop.f32.mrb[0].mxu0
    %v1433 = vpop.f32.mrb[0].mxu0
    %v1434 = vpop.f32.mrb[0].mxu0
    %1435 = vdwg.mxu0
    %v1437 = vrot.slane %v1431, 4
    %v1439 = vadd.f32 %v279, %v1437
    %v1440 = vxor.u32 %v1439, 2147483648
    %v1441 = vmul.f32 %v1440, 1.442695
    %v1442 = vpow.pop %v1441
    %v1443 = vadd.f32 %v1442, 1.0
    %v1444 = vrcp.pop %v1443
    %v1445 = vmul.f32 1.0, %v1444
    %v1446 = vtanh.pop %v1439
    %v1448 = vrot.slane %v1381, 6
    %v1450 = vmul.f32 %v1445, %v1448
    %1452 = vrot.lane.b32.xlu0 %v1446, 64
    %v1453 = vpop.permute.xlu0 %1452
    %v1455 = vmul.f32 %v1445, %v1453
    %1457 = vrot.lane.b32.xlu0 %v1455, 32
    %v1458 = vpop.permute.xlu0 %1457
    %v1460 = vadd.f32 %v1450, %v1458
    %v1461 = vtanh.pop %v1460
    %1463 = vrot.lane.b32.xlu0 %v1461, 64
    %v1464 = vpop.permute.xlu0 %1463
    %v1466 = vmul.f32 %v1445, %v1464
    %v1467 = vpack.c.bf16 %v1466, %v1466
    %v1469 = vrot.slane %v1467, 2
    %1470 = vrot.lane.b32.xlu0 %v1469, 32
    %v1471 = vpop.permute.xlu0 %1470
    %v1473 = vsel %vm305, %v1471, 0
    %1475 = vmatprep.subr.bf16.mxu0 0
    %1476 = vmatpush1.bf16.msra.mxu0 %v301
    %1477 = vmatprep.subr.bf16.mxu0 0
    %1478 = vmatpush1.bf16.msra.mxu0 %v302
    %1479 = vmatprep.subr.bf16.mxu0 0
    %1480 = vmatpush1.bf16.msra.mxu0 0
    %1481 = vmatprep.subr.bf16.mxu0 0
    %1482 = vmatpush1.bf16.msra.mxu0 0
    %1483 = vmatprep.subr.bf16.mxu0 0
    %1484 = vmatpush1.bf16.msra.mxu0 0
    %1485 = vmatprep.subr.bf16.mxu0 0
    %1486 = vmatpush1.bf16.msra.mxu0 0
    %1487 = vmatprep.subr.bf16.mxu0 0
    %1488 = vmatpush1.bf16.msra.mxu0 0
    %1489 = vmatprep.subr.bf16.mxu0 0
    %1490 = vmatpush1.bf16.msra.mxu0 0
    %1491 = vmatprep.subr.bf16.mxu0 0
    %1492 = vmatpush1.bf16.msra.mxu0 0
    %1493 = vmatprep.subr.bf16.mxu0 0
    %1494 = vmatpush1.bf16.msra.mxu0 0
    %1495 = vmatprep.subr.bf16.mxu0 0
    %1496 = vmatpush1.bf16.msra.mxu0 0
    %1497 = vmatprep.subr.bf16.mxu0 0
    %1498 = vmatpush1.bf16.msra.mxu0 0
    %1499 = vmatprep.subr.bf16.mxu0 0
    %1500 = vmatpush1.bf16.msra.mxu0 0
    %1501 = vmatprep.subr.bf16.mxu0 0
    %1502 = vmatpush1.bf16.msra.mxu0 0
    %1503 = vmatprep.subr.bf16.mxu0 0
    %1504 = vmatpush1.bf16.msra.mxu0 0
    %1505 = vmatprep.subr.bf16.mxu0 0
    %1506 = vmatpush1.bf16.msra.mxu0 0
    %1507 = vmatprep.mubr.bf16.mxu0 0
    %1508 = vmatmul.mubr.bf16.gmra.mrb[0].mxu0 %v1473
    %v1509 = vpop.f32.mrb[0].mxu0
    %v1510 = vadd.f32 0.0, %v1509
    %v1511 = vpop.f32.mrb[0].mxu0
    %v1512 = vpop.f32.mrb[0].mxu0
    %v1513 = vpop.f32.mrb[0].mxu0
    %1514 = vdwg.mxu0
    %v1516 = vrot.slane %v1510, 2
    %v1518 = vadd.f32 %v279, %v1516
    %v1519 = vxor.u32 %v1518, 2147483648
    %v1520 = vmul.f32 %v1519, 1.442695
    %v1521 = vpow.pop %v1520
    %v1522 = vadd.f32 %v1521, 1.0
    %v1523 = vrcp.pop %v1522
    %v1524 = vmul.f32 1.0, %v1523
    %v1525 = vtanh.pop %v1518
    %v1527 = vrot.slane %v1460, 6
    %v1529 = vmul.f32 %v1524, %v1527
    %1531 = vrot.lane.b32.xlu0 %v1525, 64
    %v1532 = vpop.permute.xlu0 %1531
    %v1534 = vmul.f32 %v1524, %v1532
    %1536 = vrot.lane.b32.xlu0 %v1534, 32
    %v1537 = vpop.permute.xlu0 %1536
    %v1539 = vadd.f32 %v1529, %v1537
    %v1540 = vtanh.pop %v1539
    %1542 = vrot.lane.b32.xlu0 %v1540, 64
    %v1543 = vpop.permute.xlu0 %1542
    %v1545 = vmul.f32 %v1524, %v1543
    %v1546 = vpack.c.bf16 %v1545, %v1545
    %v1548 = vrot.slane %v1546, 3
    %1549 = vrot.lane.b32.xlu0 %v1548, 32
    %v1550 = vpop.permute.xlu0 %1549
    %v1552 = vsel %vm305, %v1550, 0
    %1554 = vmatprep.subr.bf16.mxu0 0
    %1555 = vmatpush1.bf16.msra.mxu0 %v301
    %1556 = vmatprep.subr.bf16.mxu0 0
    %1557 = vmatpush1.bf16.msra.mxu0 %v302
    %1558 = vmatprep.subr.bf16.mxu0 0
    %1559 = vmatpush1.bf16.msra.mxu0 0
    %1560 = vmatprep.subr.bf16.mxu0 0
    %1561 = vmatpush1.bf16.msra.mxu0 0
    %1562 = vmatprep.subr.bf16.mxu0 0
    %1563 = vmatpush1.bf16.msra.mxu0 0
    %1564 = vmatprep.subr.bf16.mxu0 0
    %1565 = vmatpush1.bf16.msra.mxu0 0
    %1566 = vmatprep.subr.bf16.mxu0 0
    %1567 = vmatpush1.bf16.msra.mxu0 0
    %1568 = vmatprep.subr.bf16.mxu0 0
    %1569 = vmatpush1.bf16.msra.mxu0 0
    %1570 = vmatprep.subr.bf16.mxu0 0
    %1571 = vmatpush1.bf16.msra.mxu0 0
    %1572 = vmatprep.subr.bf16.mxu0 0
    %1573 = vmatpush1.bf16.msra.mxu0 0
    %1574 = vmatprep.subr.bf16.mxu0 0
    %1575 = vmatpush1.bf16.msra.mxu0 0
    %1576 = vmatprep.subr.bf16.mxu0 0
    %1577 = vmatpush1.bf16.msra.mxu0 0
    %1578 = vmatprep.subr.bf16.mxu0 0
    %1579 = vmatpush1.bf16.msra.mxu0 0
    %1580 = vmatprep.subr.bf16.mxu0 0
    %1581 = vmatpush1.bf16.msra.mxu0 0
    %1582 = vmatprep.subr.bf16.mxu0 0
    %1583 = vmatpush1.bf16.msra.mxu0 0
    %1584 = vmatprep.subr.bf16.mxu0 0
    %1585 = vmatpush1.bf16.msra.mxu0 0
    %1586 = vmatprep.mubr.bf16.mxu0 0
    %1587 = vmatmul.mubr.bf16.gmra.mrb[0].mxu0 %v1552
    %v1588 = vpop.f32.mrb[0].mxu0
    %v1589 = vadd.f32 0.0, %v1588
    %v1590 = vpop.f32.mrb[0].mxu0
    %v1591 = vpop.f32.mrb[0].mxu0
    %v1592 = vpop.f32.mrb[0].mxu0
    %1593 = vdwg.mxu0
    %v1594 = vadd.f32 %v284, %v1589
    %v1595 = vxor.u32 %v1594, 2147483648
    %v1596 = vmul.f32 %v1595, 1.442695
    %v1597 = vpow.pop %v1596
    %v1598 = vadd.f32 %v1597, 1.0
    %v1599 = vrcp.pop %v1598
    %v1600 = vmul.f32 1.0, %v1599
    %v1601 = vtanh.pop %v1594
    %v1603 = vrot.slane %v1539, 6
    %v1605 = vmul.f32 %v1600, %v1603
    %1607 = vrot.lane.b32.xlu0 %v1601, 64
    %v1608 = vpop.permute.xlu0 %1607
    %v1610 = vmul.f32 %v1600, %v1608
    %1612 = vrot.lane.b32.xlu0 %v1610, 32
    %v1613 = vpop.permute.xlu0 %1612
    %v1615 = vadd.f32 %v1605, %v1613
    %v1616 = vtanh.pop %v1615
    %1618 = vrot.lane.b32.xlu0 %v1616, 64
    %v1619 = vpop.permute.xlu0 %1618
    %v1621 = vmul.f32 %v1600, %v1619
    %v1622 = vpack.c.bf16 %v1621, %v1621
    %1624 = vrot.lane.b32.xlu0 %v1622, 32
    %v1625 = vpop.permute.xlu0 %1624
    %v1627 = vsel %vm305, %v1625, 0
    %1629 = vmatprep.subr.bf16.mxu0 0
    %1630 = vmatpush1.bf16.msra.mxu0 %v301
    %1631 = vmatprep.subr.bf16.mxu0 0
    %1632 = vmatpush1.bf16.msra.mxu0 %v302
    %1633 = vmatprep.subr.bf16.mxu0 0
    %1634 = vmatpush1.bf16.msra.mxu0 0
    %1635 = vmatprep.subr.bf16.mxu0 0
    %1636 = vmatpush1.bf16.msra.mxu0 0
    %1637 = vmatprep.subr.bf16.mxu0 0
    %1638 = vmatpush1.bf16.msra.mxu0 0
    %1639 = vmatprep.subr.bf16.mxu0 0
    %1640 = vmatpush1.bf16.msra.mxu0 0
    %1641 = vmatprep.subr.bf16.mxu0 0
    %1642 = vmatpush1.bf16.msra.mxu0 0
    %1643 = vmatprep.subr.bf16.mxu0 0
    %1644 = vmatpush1.bf16.msra.mxu0 0
    %1645 = vmatprep.subr.bf16.mxu0 0
    %1646 = vmatpush1.bf16.msra.mxu0 0
    %1647 = vmatprep.subr.bf16.mxu0 0
    %1648 = vmatpush1.bf16.msra.mxu0 0
    %1649 = vmatprep.subr.bf16.mxu0 0
    %1650 = vmatpush1.bf16.msra.mxu0 0
    %1651 = vmatprep.subr.bf16.mxu0 0
    %1652 = vmatpush1.bf16.msra.mxu0 0
    %1653 = vmatprep.subr.bf16.mxu0 0
    %1654 = vmatpush1.bf16.msra.mxu0 0
    %1655 = vmatprep.subr.bf16.mxu0 0
    %1656 = vmatpush1.bf16.msra.mxu0 0
    %1657 = vmatprep.subr.bf16.mxu0 0
    %1658 = vmatpush1.bf16.msra.mxu0 0
    %1659 = vmatprep.subr.bf16.mxu0 0
    %1660 = vmatpush1.bf16.msra.mxu0 0
    %1661 = vmatprep.mubr.bf16.mxu0 0
    %1662 = vmatmul.mubr.bf16.gmra.mrb[0].mxu0 %v1627
    %v1663 = vpop.f32.mrb[0].mxu0
    %v1664 = vadd.f32 0.0, %v1663
    %v1665 = vpop.f32.mrb[0].mxu0
    %v1666 = vpop.f32.mrb[0].mxu0
    %v1667 = vpop.f32.mrb[0].mxu0
    %1668 = vdwg.mxu0
    %v1670 = vrot.slane %v1664, 6
    %v1672 = vadd.f32 %v284, %v1670
    %v1673 = vxor.u32 %v1672, 2147483648
    %v1674 = vmul.f32 %v1673, 1.442695
    %v1675 = vpow.pop %v1674
    %v1676 = vadd.f32 %v1675, 1.0
    %v1677 = vrcp.pop %v1676
    %v1678 = vmul.f32 1.0, %v1677
    %v1679 = vtanh.pop %v1672
    %v1681 = vrot.slane %v1615, 6
    %v1683 = vmul.f32 %v1678, %v1681
    %1685 = vrot.lane.b32.xlu0 %v1679, 64
    %v1686 = vpop.permute.xlu0 %1685
    %v1688 = vmul.f32 %v1678, %v1686
    %1690 = vrot.lane.b32.xlu0 %v1688, 32
    %v1691 = vpop.permute.xlu0 %1690
    %v1693 = vadd.f32 %v1683, %v1691
    %v1694 = vtanh.pop %v1693
    %1696 = vrot.lane.b32.xlu0 %v1694, 64
    %v1697 = vpop.permute.xlu0 %1696
    %v1699 = vmul.f32 %v1678, %v1697
    %v1700 = vpack.c.bf16 %v1699, %v1699
    %v1702 = vrot.slane %v1700, 1
    %1703 = vrot.lane.b32.xlu0 %v1702, 32
    %v1704 = vpop.permute.xlu0 %1703
    %v1706 = vsel %vm305, %v1704, 0
    %1708 = vmatprep.subr.bf16.mxu0 0
    %1709 = vmatpush1.bf16.msra.mxu0 %v301
    %1710 = vmatprep.subr.bf16.mxu0 0
    %1711 = vmatpush1.bf16.msra.mxu0 %v302
    %1712 = vmatprep.subr.bf16.mxu0 0
    %1713 = vmatpush1.bf16.msra.mxu0 0
    %1714 = vmatprep.subr.bf16.mxu0 0
    %1715 = vmatpush1.bf16.msra.mxu0 0
    %1716 = vmatprep.subr.bf16.mxu0 0
    %1717 = vmatpush1.bf16.msra.mxu0 0
    %1718 = vmatprep.subr.bf16.mxu0 0
    %1719 = vmatpush1.bf16.msra.mxu0 0
    %1720 = vmatprep.subr.bf16.mxu0 0
    %1721 = vmatpush1.bf16.msra.mxu0 0
    %1722 = vmatprep.subr.bf16.mxu0 0
    %1723 = vmatpush1.bf16.msra.mxu0 0
    %1724 = vmatprep.subr.bf16.mxu0 0
    %1725 = vmatpush1.bf16.msra.mxu0 0
    %1726 = vmatprep.subr.bf16.mxu0 0
    %1727 = vmatpush1.bf16.msra.mxu0 0
    %1728 = vmatprep.subr.bf16.mxu0 0
    %1729 = vmatpush1.bf16.msra.mxu0 0
    %1730 = vmatprep.subr.bf16.mxu0 0
    %1731 = vmatpush1.bf16.msra.mxu0 0
    %1732 = vmatprep.subr.bf16.mxu0 0
    %1733 = vmatpush1.bf16.msra.mxu0 0
    %1734 = vmatprep.subr.bf16.mxu0 0
    %1735 = vmatpush1.bf16.msra.mxu0 0
    %1736 = vmatprep.subr.bf16.mxu0 0
    %1737 = vmatpush1.bf16.msra.mxu0 0
    %1738 = vmatprep.subr.bf16.mxu0 0
    %1739 = vmatpush1.bf16.msra.mxu0 0
    %1740 = vmatprep.mubr.bf16.mxu0 0
    %1741 = vmatmul.mubr.bf16.gmra.mrb[0].mxu0 %v1706
    %v1742 = vpop.f32.mrb[0].mxu0
    %v1743 = vadd.f32 0.0, %v1742
    %v1744 = vpop.f32.mrb[0].mxu0
    %v1745 = vpop.f32.mrb[0].mxu0
    %v1746 = vpop.f32.mrb[0].mxu0
    %1747 = vdwg.mxu0
    %v1749 = vrot.slane %v1743, 4
    %v1751 = vadd.f32 %v284, %v1749
    %v1752 = vxor.u32 %v1751, 2147483648
    %v1753 = vmul.f32 %v1752, 1.442695
    %v1754 = vpow.pop %v1753
    %v1755 = vadd.f32 %v1754, 1.0
    %v1756 = vrcp.pop %v1755
    %v1757 = vmul.f32 1.0, %v1756
    %v1758 = vtanh.pop %v1751
    %v1760 = vrot.slane %v1693, 6
    %v1762 = vmul.f32 %v1757, %v1760
    %1764 = vrot.lane.b32.xlu0 %v1758, 64
    %v1765 = vpop.permute.xlu0 %1764
    %v1767 = vmul.f32 %v1757, %v1765
    %1769 = vrot.lane.b32.xlu0 %v1767, 32
    %v1770 = vpop.permute.xlu0 %1769
    %v1772 = vadd.f32 %v1762, %v1770
    %v1773 = vtanh.pop %v1772
    %1775 = vrot.lane.b32.xlu0 %v1773, 64
    %v1776 = vpop.permute.xlu0 %1775
    %v1778 = vmul.f32 %v1757, %v1776
    %v1779 = vpack.c.bf16 %v1778, %v1778
    %v1781 = vrot.slane %v1779, 2
    %1782 = vrot.lane.b32.xlu0 %v1781, 32
    %v1783 = vpop.permute.xlu0 %1782
    %v1785 = vsel %vm305, %v1783, 0
    %1787 = vmatprep.subr.bf16.mxu0 0
    %1788 = vmatpush1.bf16.msra.mxu0 %v301
    %1789 = vmatprep.subr.bf16.mxu0 0
    %1790 = vmatpush1.bf16.msra.mxu0 %v302
    %1791 = vmatprep.subr.bf16.mxu0 0
    %1792 = vmatpush1.bf16.msra.mxu0 0
    %1793 = vmatprep.subr.bf16.mxu0 0
    %1794 = vmatpush1.bf16.msra.mxu0 0
    %1795 = vmatprep.subr.bf16.mxu0 0
    %1796 = vmatpush1.bf16.msra.mxu0 0
    %1797 = vmatprep.subr.bf16.mxu0 0
    %1798 = vmatpush1.bf16.msra.mxu0 0
    %1799 = vmatprep.subr.bf16.mxu0 0
    %1800 = vmatpush1.bf16.msra.mxu0 0
    %1801 = vmatprep.subr.bf16.mxu0 0
    %1802 = vmatpush1.bf16.msra.mxu0 0
    %1803 = vmatprep.subr.bf16.mxu0 0
    %1804 = vmatpush1.bf16.msra.mxu0 0
    %1805 = vmatprep.subr.bf16.mxu0 0
    %1806 = vmatpush1.bf16.msra.mxu0 0
    %1807 = vmatprep.subr.bf16.mxu0 0
    %1808 = vmatpush1.bf16.msra.mxu0 0
    %1809 = vmatprep.subr.bf16.mxu0 0
    %1810 = vmatpush1.bf16.msra.mxu0 0
    %1811 = vmatprep.subr.bf16.mxu0 0
    %1812 = vmatpush1.bf16.msra.mxu0 0
    %1813 = vmatprep.subr.bf16.mxu0 0
    %1814 = vmatpush1.bf16.msra.mxu0 0
    %1815 = vmatprep.subr.bf16.mxu0 0
    %1816 = vmatpush1.bf16.msra.mxu0 0
    %1817 = vmatprep.subr.bf16.mxu0 0
    %1818 = vmatpush1.bf16.msra.mxu0 0
    %1819 = vmatprep.mubr.bf16.mxu0 0
    %1820 = vmatmul.mubr.bf16.gmra.mrb[0].mxu0 %v1785
    %v1821 = vpop.f32.mrb[0].mxu0
    %v1822 = vadd.f32 0.0, %v1821
    %v1823 = vpop.f32.mrb[0].mxu0
    %v1824 = vpop.f32.mrb[0].mxu0
    %v1825 = vpop.f32.mrb[0].mxu0
    %1826 = vdwg.mxu0
    %v1828 = vrot.slane %v1822, 2
    %v1830 = vadd.f32 %v284, %v1828
    %v1831 = vxor.u32 %v1830, 2147483648
    %v1832 = vmul.f32 %v1831, 1.442695
    %v1833 = vpow.pop %v1832
    %v1834 = vadd.f32 %v1833, 1.0
    %v1835 = vrcp.pop %v1834
    %v1836 = vmul.f32 1.0, %v1835
    %v1837 = vtanh.pop %v1830
    %v1839 = vrot.slane %v1772, 6
    %v1841 = vmul.f32 %v1836, %v1839
    %1843 = vrot.lane.b32.xlu0 %v1837, 64
    %v1844 = vpop.permute.xlu0 %1843
    %v1846 = vmul.f32 %v1836, %v1844
    %1848 = vrot.lane.b32.xlu0 %v1846, 32
    %v1849 = vpop.permute.xlu0 %1848
    %v1851 = vadd.f32 %v1841, %v1849
    %v1852 = vtanh.pop %v1851
    %1854 = vrot.lane.b32.xlu0 %v1852, 64
    %v1855 = vpop.permute.xlu0 %1854
    %v1857 = vmul.f32 %v1836, %v1855
    %v1858 = vpack.c.bf16 %v1857, %v1857
    %v1859 = vld [vmem:[%s6] sm:$0xf]
    %v1860 = vld [vmem:[%s6 + $0x4] sm:$0xf]
    %v1861 = vld [vmem:[%s6 + $0x8] sm:$0xf]
    %v1862 = vld [vmem:[%s6 + $0xc] sm:$0xf]
    %v1863 = vld [vmem:[%s7] sm:$0x1]
    %v1865 = vlaneseq
    %v1866 = vshrl.u32 %v1865, 7
    %v1867 = vsub.s32 0, %v1866
    %v1868 = vrot.slane %v1863, %v1867
    %v1871 = vrot.slane %v1858, 3
    %1872 = vrot.lane.b32.xlu0 %v1871, 32
    %v1873 = vpop.permute.xlu0 %1872
    %v1878 = vunpack.c.l.b16 %v1859
    %v1879 = vunpack.c.l.b16 %v1860
    %v1880 = vunpack.c.l.b16 %v1861
    %v1881 = vunpack.c.l.b16 %v1862
    %v1882 = vpack.c.b16 %v1879, %v1878
    %v1883 = vpack.c.b16 %v1881, %v1880
    %v1887 = vsel %vm305, %v1873, 0
    %1889 = vmatprep.subr.bf16.mxu0 0
    %1890 = vmatpush1.bf16.msra.mxu0 %v1882
    %1891 = vmatprep.subr.bf16.mxu0 0
    %1892 = vmatpush1.bf16.msra.mxu0 %v1883
    %1893 = vmatprep.subr.bf16.mxu0 0
    %1894 = vmatpush1.bf16.msra.mxu0 0
    %1895 = vmatprep.subr.bf16.mxu0 0
    %1896 = vmatpush1.bf16.msra.mxu0 0
    %1897 = vmatprep.subr.bf16.mxu0 0
    %1898 = vmatpush1.bf16.msra.mxu0 0
    %1899 = vmatprep.subr.bf16.mxu0 0
    %1900 = vmatpush1.bf16.msra.mxu0 0
    %1901 = vmatprep.subr.bf16.mxu0 0
    %1902 = vmatpush1.bf16.msra.mxu0 0
    %1903 = vmatprep.subr.bf16.mxu0 0
    %1904 = vmatpush1.bf16.msra.mxu0 0
    %1905 = vmatprep.subr.bf16.mxu0 0
    %1906 = vmatpush1.bf16.msra.mxu0 0
    %1907 = vmatprep.subr.bf16.mxu0 0
    %1908 = vmatpush1.bf16.msra.mxu0 0
    %1909 = vmatprep.subr.bf16.mxu0 0
    %1910 = vmatpush1.bf16.msra.mxu0 0
    %1911 = vmatprep.subr.bf16.mxu0 0
    %1912 = vmatpush1.bf16.msra.mxu0 0
    %1913 = vmatprep.subr.bf16.mxu0 0
    %1914 = vmatpush1.bf16.msra.mxu0 0
    %1915 = vmatprep.subr.bf16.mxu0 0
    %1916 = vmatpush1.bf16.msra.mxu0 0
    %1917 = vmatprep.subr.bf16.mxu0 0
    %1918 = vmatpush1.bf16.msra.mxu0 0
    %1919 = vmatprep.subr.bf16.mxu0 0
    %1920 = vmatpush1.bf16.msra.mxu0 0
    %1921 = vmatprep.mubr.bf16.mxu0 0
    %1922 = vmatmul.mubr.bf16.gmra.mrb[0].mxu0 %v1887
    %v1923 = vpop.f32.mrb[0].mxu0
    %v1924 = vadd.f32 %v1868, %v1923
    %v1925 = vpop.f32.mrb[0].mxu0
    %v1926 = vpop.f32.mrb[0].mxu0
    %v1927 = vpop.f32.mrb[0].mxu0
    %1928 = vdwg.mxu0
    %1929 = vst [vmem:[#allocation2] sm:$0x3] %v1924
    // Predicated region
    $region34: #{forward.1} parent=1 // pred_check
      _
    $region35: #{forward.1} parent=1 // pred_check_branch
      %1931 = sbr.rel (0) target = $region37
    $region36: #{forward.1} parent=1 // pred_region
      %s1933 = ssub.s32 32, 32
      %1934 = vsyncadd [#allocation3], %s1933
      %s1936 = sshll.u32 [#allocation2], 4
      %s1937 = int_to_ptr.vmem [resolvable:$true] %s1936
      %1939 = dma.vmem_to_hbm [thread:$0]  %s1937, 32, %s8, [#allocation3]
    $region37: #{forward.1} parent=1 // pred_fallthru
      _
    // Predicated region
    $region38: #{forward.1} parent=1 // pred_check
      _
    $region39: #{forward.1} parent=1 // pred_check_branch
      %1941 = sbr.rel (0) target = $region41
    $region40: #{forward.1} parent=1 // pred_region
      %1942 = dma.done [#allocation3], 32
    $region41: #{forward.1} parent=1 // pred_fallthru
      _
    %1943 = vsyncpa [#allocation3], 1

</llo_original>
